<compile_context>
chip_gen: v6e
topology: v6e:2x2x1
jax: 0.10.0
libtpu: 0.0.40
codegen_flags: <defaults>
</compile_context>

<pallas_src>
import functools

import jax
import jax.numpy as jnp
from jax.experimental import pallas as pl
from jax.experimental.pallas import tpu as pltpu


def _sublane(dtype):
    return {4: 8, 2: 16, 1: 32}.get(jnp.dtype(dtype).itemsize, 8)


def _round_up(v, m):
    return ((v + m - 1) // m) * m


# ---------------------------------------------------------------------------
# k == 1, s == 1 fast path: a 1x1 conv is a plain (C2, C1) @ (C1, cols) matmul.
# ---------------------------------------------------------------------------
def _cbl_1x1_kernel(x_ref, w_ref, b_ref, o_ref):
    acc = jnp.dot(w_ref[...], x_ref[...], preferred_element_type=jnp.float32)
    y = acc + b_ref[...]
    y = y * jax.nn.sigmoid(y)
    o_ref[...] = y.astype(o_ref.dtype)


# ---------------------------------------------------------------------------
# General kernel: per-row-tile im2col + ONE MXU matmul + folded-BN bias + SiLU.
# ---------------------------------------------------------------------------
def _cbl_kernel(x_ref, w_ref, b_ref, o_ref, xflat_ref, col_ref, *,
                k, s, pad, h, w, c1, pitch, wleft, lead, use_mask,
                tile_rows, tile_cols, tile_in_rows, l_tile, data_end):
    """x_ref:  (C1, H, W)        whole image (resident across row tiles)
       w_ref:  (C2, k*k*C1p)     conv weights with BN scale folded (C1 padded)
       b_ref:  (C2, 1)           folded BN bias (f32)
       o_ref:  (C2, tile_cols)   flattened NCHW output tile (lane-dense)
       xflat_ref: (C1p, l_tile)  per-tile flat zero-padded input slab
       col_ref:   (k*k*C1p, tile_cols)  im2col tile
    """
    c1p = xflat_ref.shape[0]
    cdt = xflat_ref.dtype
    r = pl.program_id(1)
    row0 = r * (tile_rows * s) - pad          # first padded input row of tile

    # ---- 1) build the flat, zero-padded input slab for this row tile -------
    if use_mask:
        # s == 1, odd k: rows stored back-to-back; horizontal padding is
        # emulated by lane masks, so only tiny margins need zeroing.
        if c1p > c1:
            xflat_ref[c1:, :] = jnp.zeros((c1p - c1, l_tile), cdt)
        if lead > 0:
            xflat_ref[0:c1, 0:lead] = jnp.zeros((c1, lead), cdt)
        if l_tile > data_end:
            xflat_ref[0:c1, data_end:l_tile] = jnp.zeros(
                (c1, l_tile - data_end), cdt)
    else:
        # stride > 1 / even k: real horizontal zero padding; the per-tile slab
        # is small, so a full zero fill is the simplest correct init.
        xflat_ref[...] = jnp.zeros_like(xflat_ref)

    for j in range(tile_in_rows):
        gi = row0 + j                          # global input row (dynamic)
        dst = lead + j * pitch + wleft         # static lane offset
        valid = jnp.logical_and(gi >= 0, gi < h)

        @pl.when(valid)
        def _copy_row():
            xflat_ref[0:c1, dst:dst + w] = x_ref[:, gi, :]

        if use_mask:
            @pl.when(jnp.logical_not(valid))
            def _zero_row():                   # vertical "same" padding rows
                xflat_ref[0:c1, dst:dst + w] = jnp.zeros((c1, w), cdt)

    # ---- 2) im2col: every tap is a (strided) lane slice of the slab --------
    if use_mask:
        wo = jax.lax.broadcasted_iota(jnp.int32, (1, tile_cols), 1) % w
        masks = {}
        for kw in range(k):
            if kw != pad:
                m = jnp.logical_and(wo >= (pad - kw), wo < (w + pad - kw))
                masks[kw] = jnp.broadcast_to(m, (c1p, tile_cols))

    for kh in range(k):
        for kw in range(k):
            t = kh * k + kw
            off = lead + kh * pitch + wleft + kw - pad     # static
            if s == 1:
                v = xflat_ref[:, off:off + tile_cols]
            else:
                span = s * (tile_cols - 1) + 1
                chunk = xflat_ref[:, off:off + span]
                v = jax.lax.slice(chunk, (0, 0), (c1p, span), (1, s))
            if use_mask and kw != pad:
                v = jnp.where(masks[kw], v, jnp.zeros_like(v))
            col_ref[t * c1p:(t + 1) * c1p, :] = v

    # ---- 3) one MXU matmul over K = k*k*C1p, f32 accumulation --------------
    acc = jnp.dot(w_ref[...], col_ref[...], preferred_element_type=jnp.float32)

    # ---- 4) folded-BN bias + SiLU epilogue, lane-dense store ---------------
    y = acc + b_ref[...]
    y = y * jax.nn.sigmoid(y)
    o_ref[...] = y.astype(o_ref.dtype)


def cbl_forward(x, weight, gamma, beta, running_mean, running_var, *, k, s,
                eps=1e-5, compute_dtype=None, tile_budget_bytes=12 << 20):
    """Eval-mode CBL forward.  x: (N, C1, H, W) -> (N, C2, Ho, Wo) in x.dtype.

    compute_dtype: dtype of conv inputs/weights (accumulation stays f32); pass
    jnp.bfloat16 for ~2x MXU throughput and half the im2col VMEM/bandwidth.
    """
    n, c1, h, w = x.shape
    c2 = weight.shape[0]
    pad = k // 2
    h_out = (h + 2 * pad - k) // s + 1
    w_out = (w + 2 * pad - k) // s + 1
    out_dtype = x.dtype
    if compute_dtype is None:
        compute_dtype = x.dtype
    cdt = jnp.dtype(compute_dtype)
    in_isz = cdt.itemsize
    out_isz = jnp.dtype(out_dtype).itemsize

    # Fold eval-mode BN into the conv weights + per-channel bias (plain JAX).
    scale = gamma / jnp.sqrt(running_var + eps)                       # (C2,)
    bias = (beta - running_mean * scale).astype(jnp.float32).reshape(c2, 1)
    w_scaled = weight * scale[:, None, None, None]                    # (C2,C1,k,k)

    # ---------------- k==1, s==1 fast path: no im2col -----------------------
    if k == 1 and s == 1:
        w_mat = w_scaled.reshape(c2, c1).astype(compute_dtype)
        x_flat = x.astype(compute_dtype).reshape(n, c1, h * w)
        total = h * w
        per_col = 2 * (c1 * in_isz + c2 * out_isz)        # double-buffered io
        cands = [total] + [d for d in range(128, total, 128) if total % d == 0]
        fits = [d for d in cands if d * per_col <= tile_budget_bytes]
        tile_cols = max(fits) if fits else min(cands)
        cost = pl.CostEstimate(
            flops=2 * n * total * c1 * c2,
            transcendentals=n * total * c2,
            bytes_accessed=(n * c1 * total * in_isz + c2 * c1 * in_isz
                            + n * c2 * total * out_isz))
        out = pl.pallas_call(
            _cbl_1x1_kernel,
            out_shape=jax.ShapeDtypeStruct((n, c2, total), out_dtype),
            grid_spec=pltpu.PrefetchScalarGridSpec(
                num_scalar_prefetch=0,
                grid=(n, total // tile_cols),
                in_specs=[
                    pl.BlockSpec((None, c1, tile_cols), lambda b, t: (b, 0, t)),
                    pl.BlockSpec((c2, c1), lambda b, t: (0, 0)),
                    pl.BlockSpec((c2, 1), lambda b, t: (0, 0)),
                ],
                out_specs=pl.BlockSpec((None, c2, tile_cols),
                                       lambda b, t: (b, 0, t)),
            ),
            compiler_params=pltpu.CompilerParams(
                dimension_semantics=("parallel", "parallel")),
            cost_estimate=cost,
        )(x_flat, w_mat, bias)
        return out.reshape(n, c2, h_out, w_out)

    # ---------------- general path: row-tiled im2col + one matmul -----------
    if s == 1 and w_out == w:
        # odd k, stride 1: acc pitch == Wo == W, edge taps lane-masked, no crop
        pitch, wleft, lead, use_mask = w, 0, pad, True
    else:
        # real horizontal padding; cols [Wo, pitch) of each row are cropped.
        pitch, wleft, lead, use_mask = w + 2 * pad, pad, 0, False

    sub = _sublane(cdt)
    c1p = _round_up(c1, sub)
    kkp = k * k * c1p

    # (C2,C1,kh,kw) -> (C2,kh,kw,C1p) -> (C2, k*k*C1p): tap-major, chan-minor.
    w4 = jnp.transpose(w_scaled, (0, 2, 3, 1))
    if c1p > c1:
        w4 = jnp.pad(w4, ((0, 0), (0, 0), (0, 0), (0, c1p - c1)))
    w_mat = w4.reshape(c2, kkp).astype(compute_dtype)

    def geom(tr):
        t_in = (tr - 1) * s + k
        tcols = tr * pitch
        max_off = lead + (k - 1) * pitch + wleft + (k - 1) - pad
        read_end = max_off + s * (tcols - 1) + 1
        data_end = lead + t_in * pitch
        return t_in, tcols, data_end, max(read_end, data_end)

    def tile_bytes(tr):
        _, tcols, _, l_tile = geom(tr)
        return ((k * k * c1p * tcols + c1p * l_tile) * in_isz
                + 2 * c2 * tcols * out_isz)

    # tile_rows must divide Ho and keep the output block lane-dense.
    cands = [d for d in range(1, h_out + 1)
             if h_out % d == 0 and (d == h_out or (d * pitch) % 128 == 0)]
    fits = [d for d in cands if tile_bytes(d) <= tile_budget_bytes]
    tile_rows = max(fits) if fits else min(cands)
    tile_in_rows, tile_cols, data_end, l_tile = geom(tile_rows)
    num_row_tiles = h_out // tile_rows

    est = (2 * c1 * h * w * in_isz + 2 * c2 * kkp * in_isz + 2 * c2 * 4
           + 2 * c2 * tile_cols * out_isz
           + (k * k * c1p * tile_cols + c1p * l_tile) * in_isz)
    vmem_limit = int(min(est + (16 << 20), 96 << 20)) if est > (24 << 20) else None

    kernel = functools.partial(
        _cbl_kernel, k=k, s=s, pad=pad, h=h, w=w, c1=c1, pitch=pitch,
        wleft=wleft, lead=lead, use_mask=use_mask, tile_rows=tile_rows,
        tile_cols=tile_cols, tile_in_rows=tile_in_rows, l_tile=l_tile,
        data_end=data_end)

    cost = pl.CostEstimate(
        flops=2 * n * h_out * w_out * k * k * c1 * c2,
        transcendentals=n * h_out * w_out * c2,
        bytes_accessed=(n * c1 * h * w * in_isz + c2 * kkp * in_isz
                        + n * c2 * h_out * pitch * out_isz))

    out = pl.pallas_call(
        kernel,
        out_shape=jax.ShapeDtypeStruct((n, c2, h_out * pitch), out_dtype),
        grid_spec=pltpu.PrefetchScalarGridSpec(
            num_scalar_prefetch=0,
            grid=(n, num_row_tiles),
            in_specs=[
                pl.BlockSpec((None, c1, h, w), lambda b, r: (b, 0, 0, 0)),
                pl.BlockSpec((c2, kkp), lambda b, r: (0, 0)),
                pl.BlockSpec((c2, 1), lambda b, r: (0, 0)),
            ],
            out_specs=pl.BlockSpec((None, c2, tile_cols),
                                   lambda b, r: (b, 0, r)),
            scratch_shapes=[
                pltpu.VMEM((c1p, l_tile), compute_dtype),
                pltpu.VMEM((k * k * c1p, tile_cols), compute_dtype),
            ],
        ),
        compiler_params=pltpu.CompilerParams(
            dimension_semantics=("parallel", "parallel"),
            vmem_limit_bytes=vmem_limit),
        cost_estimate=cost,
    )(x.astype(compute_dtype), w_mat, bias)

    out = out.reshape(n, c2, h_out, pitch)
    if pitch == w_out:
        return out
    return out[:, :, :, :w_out]


def _reference(x, weight, gamma, beta, running_mean, running_var, *, k, s,
               eps=1e-5):
    """Pure-JAX reference (conv + eval BN + SiLU)."""
    pad = k // 2
    y = jax.lax.conv_general_dilated(
        x, weight, window_strides=(s, s),
        padding=((pad, pad), (pad, pad)),
        dimension_numbers=("NCHW", "OIHW", "NCHW"))
    scale = gamma / jnp.sqrt(running_var + eps)
    bias = beta - running_mean * scale
    y = y * scale[None, :, None, None] + bias[None, :, None, None]
    return y * jax.nn.sigmoid(y)


if __name__ == "__main__":
    key = jax.random.PRNGKey(0)
    kx, kw_, kg, kb, km, kv = jax.random.split(key, 6)

    N, C1, H, W = 2, 4, 16, 16
    C2 = 8

    x = jax.random.normal(kx, (N, C1, H, W), dtype=jnp.float32)
    gamma = 1.0 + 0.1 * jax.random.normal(kg, (C2,), dtype=jnp.float32)
    beta = 0.1 * jax.random.normal(kb, (C2,), dtype=jnp.float32)
    rmean = 0.1 * jax.random.normal(km, (C2,), dtype=jnp.float32)
    rvar = 1.0 + 0.1 * jax.random.uniform(kv, (C2,), dtype=jnp.float32)

    def check(k, s, compute_dtype, atol, rtol, budget=12 << 20):
        wkey = jax.random.fold_in(kw_, k * 10 + s)
        weight = 0.1 * jax.random.normal(wkey, (C2, C1, k, k), dtype=jnp.float32)
        out = cbl_forward(x, weight, gamma, beta, rmean, rvar, k=k, s=s,
                          compute_dtype=compute_dtype,
                          tile_budget_bytes=budget)
        out = jax.block_until_ready(out)
        ref = _reference(x, weight, gamma, beta, rmean, rvar, k=k, s=s)
        assert out.shape == ref.shape, (out.shape, ref.shape)
        assert jnp.allclose(out, ref, atol=atol, rtol=rtol), (
            f"mismatch k={k} s={s} dtype={compute_dtype}: "
            f"max_err={float(jnp.max(jnp.abs(out - ref)))}")

    check(3, 1, jnp.float32, 1e-3, 1e-3)              # CBL(4, 8, k=3, s=1)
    check(1, 1, jnp.float32, 1e-3, 1e-3)              # module default k=1 (1x1)
    check(3, 2, jnp.float32, 1e-3, 1e-3)              # strided conv path
    check(3, 1, jnp.bfloat16, 3e-2, 3e-2)             # bf16 compute, f32 accum
    # Tiny budget forces 2 row tiles -> exercises the halo / multi-tile path.
    check(3, 1, jnp.float32, 1e-3, 1e-3, budget=60 * 1024)

    print("KERNEL_OK")
</pallas_src>

<mosaic_0001>
module attributes {stable_mosaic.version = 11 : i64} {
  func.func @_cbl_kernel(%arg0: i32, %arg1: i32, %arg2: memref<1x4x16x16xf32, #tpu.memory_space<vmem>>, %arg3: memref<8x72xf32, #tpu.memory_space<vmem>>, %arg4: memref<8x1xf32, #tpu.memory_space<vmem>>, %arg5: memref<1x8x256xf32, #tpu.memory_space<vmem>>, %arg6: memref<8x290xf32, #tpu.memory_space<vmem>>, %arg7: memref<72x256xf32, #tpu.memory_space<vmem>>) attributes {dimension_semantics = [#tpu.dimension_semantics<parallel>, #tpu.dimension_semantics<parallel>], iteration_bounds = array<i64: 2, 1>, scalar_prefetch = 0 : i64, scratch_operands = 2 : i64, tpu.core_type = #tpu.core_type<tc>, window_params = [{transform_indices = @transform_0, window_bounds = array<i64: 1, 4, 16, 16>}, {pipeline_mode = #tpu.pipeline_mode<synchronous>, transform_indices = @transform_1, window_bounds = array<i64: 8, 72>}, {pipeline_mode = #tpu.pipeline_mode<synchronous>, transform_indices = @transform_2, window_bounds = array<i64: 8, 1>}, {transform_indices = @transform_3, window_bounds = array<i64: 1, 8, 256>}]} {
    %c16_i32 = arith.constant 16 : i32
    %0 = arith.muli %arg1, %c16_i32 : i32
    %c1_i32 = arith.constant 1 : i32
    %1 = arith.subi %0, %c1_i32 : i32
    %cst = arith.constant 0.000000e+00 : f32
    %2 = vector.broadcast %cst : f32 to vector<4x290xf32>
    %c4 = arith.constant 4 : index
    %c0 = arith.constant 0 : index
    %3 = vector.load %arg6[%c4, %c0] : memref<8x290xf32, #tpu.memory_space<vmem>>, vector<4x290xf32>
    tpu.vector_store %arg6[%c4, %c0], %2 {strides = array<i32>} : memref<8x290xf32, #tpu.memory_space<vmem>>, vector<4x290xf32>,
    %cst_0 = arith.constant 0.000000e+00 : f32
    %4 = vector.broadcast %cst_0 : f32 to vector<4x1xf32>
    %c0_1 = arith.constant 0 : index
    %c0_2 = arith.constant 0 : index
    %5 = vector.load %arg6[%c0_1, %c0_2] : memref<8x290xf32, #tpu.memory_space<vmem>>, vector<4x1xf32>
    tpu.vector_store %arg6[%c0_1, %c0_2], %4 {strides = array<i32>} : memref<8x290xf32, #tpu.memory_space<vmem>>, vector<4x1xf32>,
    %cst_3 = arith.constant 0.000000e+00 : f32
    %6 = vector.broadcast %cst_3 : f32 to vector<4x1xf32>
    %c0_4 = arith.constant 0 : index
    %c289 = arith.constant 289 : index
    %7 = vector.load %arg6[%c0_4, %c289] : memref<8x290xf32, #tpu.memory_space<vmem>>, vector<4x1xf32>
    tpu.vector_store %arg6[%c0_4, %c289], %6 {strides = array<i32>} : memref<8x290xf32, #tpu.memory_space<vmem>>, vector<4x1xf32>,
    %c0_i32 = arith.constant 0 : i32
    %8 = arith.addi %1, %c0_i32 : i32
    %c0_i32_5 = arith.constant 0 : i32
    %9 = arith.cmpi sge, %8, %c0_i32_5 : i32
    %c16_i32_6 = arith.constant 16 : i32
    %10 = arith.cmpi slt, %8, %c16_i32_6 : i32
    %11 = arith.andi %9, %10 : i1
    %12 = arith.extui %11 : i1 to i32
    %c0_i32_7 = arith.constant 0 : i32
    %13 = arith.cmpi ne, %12, %c0_i32_7 : i32
    scf.if %13 {
      %c0_144 = arith.constant 0 : index
      %c0_145 = arith.constant 0 : index
      %246 = arith.index_cast %8 : i32 to index
      %c0_146 = arith.constant 0 : index
      %247 = vector.load %arg2[%c0_144, %c0_145, %246, %c0_146] : memref<1x4x16x16xf32, #tpu.memory_space<vmem>>, vector<1x4x1x16xf32>
      %248 = vector.shape_cast %247 : vector<1x4x1x16xf32> to vector<4x16xf32>
      %c0_147 = arith.constant 0 : index
      %c1_148 = arith.constant 1 : index
      %249 = vector.load %arg6[%c0_147, %c1_148] : memref<8x290xf32, #tpu.memory_space<vmem>>, vector<4x16xf32>
      tpu.vector_store %arg6[%c0_147, %c1_148], %248 {strides = array<i32>} : memref<8x290xf32, #tpu.memory_space<vmem>>, vector<4x16xf32>,
    } else {
    }
    %true = arith.constant true
    %14 = arith.xori %11, %true : i1
    %15 = arith.extui %14 : i1 to i32
    %c0_i32_8 = arith.constant 0 : i32
    %16 = arith.cmpi ne, %15, %c0_i32_8 : i32
    scf.if %16 {
      %cst_144 = arith.constant 0.000000e+00 : f32
      %246 = vector.broadcast %cst_144 : f32 to vector<4x16xf32>
      %c0_145 = arith.constant 0 : index
      %c1_146 = arith.constant 1 : index
      %247 = vector.load %arg6[%c0_145, %c1_146] : memref<8x290xf32, #tpu.memory_space<vmem>>, vector<4x16xf32>
      tpu.vector_store %arg6[%c0_145, %c1_146], %246 {strides = array<i32>} : memref<8x290xf32, #tpu.memory_space<vmem>>, vector<4x16xf32>,
    } else {
    }
    %c1_i32_9 = arith.constant 1 : i32
    %17 = arith.addi %1, %c1_i32_9 : i32
    %c0_i32_10 = arith.constant 0 : i32
    %18 = arith.cmpi sge, %17, %c0_i32_10 : i32
    %c16_i32_11 = arith.constant 16 : i32
    %19 = arith.cmpi slt, %17, %c16_i32_11 : i32
    %20 = arith.andi %18, %19 : i1
    %21 = arith.extui %20 : i1 to i32
    %c0_i32_12 = arith.constant 0 : i32
    %22 = arith.cmpi ne, %21, %c0_i32_12 : i32
    scf.if %22 {
      %c0_144 = arith.constant 0 : index
      %c0_145 = arith.constant 0 : index
      %246 = arith.index_cast %17 : i32 to index
      %c0_146 = arith.constant 0 : index
      %247 = vector.load %arg2[%c0_144, %c0_145, %246, %c0_146] : memref<1x4x16x16xf32, #tpu.memory_space<vmem>>, vector<1x4x1x16xf32>
      %248 = vector.shape_cast %247 : vector<1x4x1x16xf32> to vector<4x16xf32>
      %c0_147 = arith.constant 0 : index
      %c17_148 = arith.constant 17 : index
      %249 = vector.load %arg6[%c0_147, %c17_148] : memref<8x290xf32, #tpu.memory_space<vmem>>, vector<4x16xf32>
      tpu.vector_store %arg6[%c0_147, %c17_148], %248 {strides = array<i32>} : memref<8x290xf32, #tpu.memory_space<vmem>>, vector<4x16xf32>,
    } else {
    }
    %true_13 = arith.constant true
    %23 = arith.xori %20, %true_13 : i1
    %24 = arith.extui %23 : i1 to i32
    %c0_i32_14 = arith.constant 0 : i32
    %25 = arith.cmpi ne, %24, %c0_i32_14 : i32
    scf.if %25 {
      %cst_144 = arith.constant 0.000000e+00 : f32
      %246 = vector.broadcast %cst_144 : f32 to vector<4x16xf32>
      %c0_145 = arith.constant 0 : index
      %c17_146 = arith.constant 17 : index
      %247 = vector.load %arg6[%c0_145, %c17_146] : memref<8x290xf32, #tpu.memory_space<vmem>>, vector<4x16xf32>
      tpu.vector_store %arg6[%c0_145, %c17_146], %246 {strides = array<i32>} : memref<8x290xf32, #tpu.memory_space<vmem>>, vector<4x16xf32>,
    } else {
    }
    %c2_i32 = arith.constant 2 : i32
    %26 = arith.addi %1, %c2_i32 : i32
    %c0_i32_15 = arith.constant 0 : i32
    %27 = arith.cmpi sge, %26, %c0_i32_15 : i32
    %c16_i32_16 = arith.constant 16 : i32
    %28 = arith.cmpi slt, %26, %c16_i32_16 : i32
    %29 = arith.andi %27, %28 : i1
    %30 = arith.extui %29 : i1 to i32
    %c0_i32_17 = arith.constant 0 : i32
    %31 = arith.cmpi ne, %30, %c0_i32_17 : i32
    scf.if %31 {
      %c0_144 = arith.constant 0 : index
      %c0_145 = arith.constant 0 : index
      %246 = arith.index_cast %26 : i32 to index
      %c0_146 = arith.constant 0 : index
      %247 = vector.load %arg2[%c0_144, %c0_145, %246, %c0_146] : memref<1x4x16x16xf32, #tpu.memory_space<vmem>>, vector<1x4x1x16xf32>
      %248 = vector.shape_cast %247 : vector<1x4x1x16xf32> to vector<4x16xf32>
      %c0_147 = arith.constant 0 : index
      %c33_148 = arith.constant 33 : index
      %249 = vector.load %arg6[%c0_147, %c33_148] : memref<8x290xf32, #tpu.memory_space<vmem>>, vector<4x16xf32>
      tpu.vector_store %arg6[%c0_147, %c33_148], %248 {strides = array<i32>} : memref<8x290xf32, #tpu.memory_space<vmem>>, vector<4x16xf32>,
    } else {
    }
    %true_18 = arith.constant true
    %32 = arith.xori %29, %true_18 : i1
    %33 = arith.extui %32 : i1 to i32
    %c0_i32_19 = arith.constant 0 : i32
    %34 = arith.cmpi ne, %33, %c0_i32_19 : i32
    scf.if %34 {
      %cst_144 = arith.constant 0.000000e+00 : f32
      %246 = vector.broadcast %cst_144 : f32 to vector<4x16xf32>
      %c0_145 = arith.constant 0 : index
      %c33_146 = arith.constant 33 : index
      %247 = vector.load %arg6[%c0_145, %c33_146] : memref<8x290xf32, #tpu.memory_space<vmem>>, vector<4x16xf32>
      tpu.vector_store %arg6[%c0_145, %c33_146], %246 {strides = array<i32>} : memref<8x290xf32, #tpu.memory_space<vmem>>, vector<4x16xf32>,
    } else {
    }
    %c3_i32 = arith.constant 3 : i32
    %35 = arith.addi %1, %c3_i32 : i32
    %c0_i32_20 = arith.constant 0 : i32
    %36 = arith.cmpi sge, %35, %c0_i32_20 : i32
    %c16_i32_21 = arith.constant 16 : i32
    %37 = arith.cmpi slt, %35, %c16_i32_21 : i32
    %38 = arith.andi %36, %37 : i1
    %39 = arith.extui %38 : i1 to i32
    %c0_i32_22 = arith.constant 0 : i32
    %40 = arith.cmpi ne, %39, %c0_i32_22 : i32
    scf.if %40 {
      %c0_144 = arith.constant 0 : index
      %c0_145 = arith.constant 0 : index
      %246 = arith.index_cast %35 : i32 to index
      %c0_146 = arith.constant 0 : index
      %247 = vector.load %arg2[%c0_144, %c0_145, %246, %c0_146] : memref<1x4x16x16xf32, #tpu.memory_space<vmem>>, vector<1x4x1x16xf32>
      %248 = vector.shape_cast %247 : vector<1x4x1x16xf32> to vector<4x16xf32>
      %c0_147 = arith.constant 0 : index
      %c49 = arith.constant 49 : index
      %249 = vector.load %arg6[%c0_147, %c49] : memref<8x290xf32, #tpu.memory_space<vmem>>, vector<4x16xf32>
      tpu.vector_store %arg6[%c0_147, %c49], %248 {strides = array<i32>} : memref<8x290xf32, #tpu.memory_space<vmem>>, vector<4x16xf32>,
    } else {
    }
    %true_23 = arith.constant true
    %41 = arith.xori %38, %true_23 : i1
    %42 = arith.extui %41 : i1 to i32
    %c0_i32_24 = arith.constant 0 : i32
    %43 = arith.cmpi ne, %42, %c0_i32_24 : i32
    scf.if %43 {
      %cst_144 = arith.constant 0.000000e+00 : f32
      %246 = vector.broadcast %cst_144 : f32 to vector<4x16xf32>
      %c0_145 = arith.constant 0 : index
      %c49 = arith.constant 49 : index
      %247 = vector.load %arg6[%c0_145, %c49] : memref<8x290xf32, #tpu.memory_space<vmem>>, vector<4x16xf32>
      tpu.vector_store %arg6[%c0_145, %c49], %246 {strides = array<i32>} : memref<8x290xf32, #tpu.memory_space<vmem>>, vector<4x16xf32>,
    } else {
    }
    %c4_i32 = arith.constant 4 : i32
    %44 = arith.addi %1, %c4_i32 : i32
    %c0_i32_25 = arith.constant 0 : i32
    %45 = arith.cmpi sge, %44, %c0_i32_25 : i32
    %c16_i32_26 = arith.constant 16 : i32
    %46 = arith.cmpi slt, %44, %c16_i32_26 : i32
    %47 = arith.andi %45, %46 : i1
    %48 = arith.extui %47 : i1 to i32
    %c0_i32_27 = arith.constant 0 : i32
    %49 = arith.cmpi ne, %48, %c0_i32_27 : i32
    scf.if %49 {
      %c0_144 = arith.constant 0 : index
      %c0_145 = arith.constant 0 : index
      %246 = arith.index_cast %44 : i32 to index
      %c0_146 = arith.constant 0 : index
      %247 = vector.load %arg2[%c0_144, %c0_145, %246, %c0_146] : memref<1x4x16x16xf32, #tpu.memory_space<vmem>>, vector<1x4x1x16xf32>
      %248 = vector.shape_cast %247 : vector<1x4x1x16xf32> to vector<4x16xf32>
      %c0_147 = arith.constant 0 : index
      %c65 = arith.constant 65 : index
      %249 = vector.load %arg6[%c0_147, %c65] : memref<8x290xf32, #tpu.memory_space<vmem>>, vector<4x16xf32>
      tpu.vector_store %arg6[%c0_147, %c65], %248 {strides = array<i32>} : memref<8x290xf32, #tpu.memory_space<vmem>>, vector<4x16xf32>,
    } else {
    }
    %true_28 = arith.constant true
    %50 = arith.xori %47, %true_28 : i1
    %51 = arith.extui %50 : i1 to i32
    %c0_i32_29 = arith.constant 0 : i32
    %52 = arith.cmpi ne, %51, %c0_i32_29 : i32
    scf.if %52 {
      %cst_144 = arith.constant 0.000000e+00 : f32
      %246 = vector.broadcast %cst_144 : f32 to vector<4x16xf32>
      %c0_145 = arith.constant 0 : index
      %c65 = arith.constant 65 : index
      %247 = vector.load %arg6[%c0_145, %c65] : memref<8x290xf32, #tpu.memory_space<vmem>>, vector<4x16xf32>
      tpu.vector_store %arg6[%c0_145, %c65], %246 {strides = array<i32>} : memref<8x290xf32, #tpu.memory_space<vmem>>, vector<4x16xf32>,
    } else {
    }
    %c5_i32 = arith.constant 5 : i32
    %53 = arith.addi %1, %c5_i32 : i32
    %c0_i32_30 = arith.constant 0 : i32
    %54 = arith.cmpi sge, %53, %c0_i32_30 : i32
    %c16_i32_31 = arith.constant 16 : i32
    %55 = arith.cmpi slt, %53, %c16_i32_31 : i32
    %56 = arith.andi %54, %55 : i1
    %57 = arith.extui %56 : i1 to i32
    %c0_i32_32 = arith.constant 0 : i32
    %58 = arith.cmpi ne, %57, %c0_i32_32 : i32
    scf.if %58 {
      %c0_144 = arith.constant 0 : index
      %c0_145 = arith.constant 0 : index
      %246 = arith.index_cast %53 : i32 to index
      %c0_146 = arith.constant 0 : index
      %247 = vector.load %arg2[%c0_144, %c0_145, %246, %c0_146] : memref<1x4x16x16xf32, #tpu.memory_space<vmem>>, vector<1x4x1x16xf32>
      %248 = vector.shape_cast %247 : vector<1x4x1x16xf32> to vector<4x16xf32>
      %c0_147 = arith.constant 0 : index
      %c81 = arith.constant 81 : index
      %249 = vector.load %arg6[%c0_147, %c81] : memref<8x290xf32, #tpu.memory_space<vmem>>, vector<4x16xf32>
      tpu.vector_store %arg6[%c0_147, %c81], %248 {strides = array<i32>} : memref<8x290xf32, #tpu.memory_space<vmem>>, vector<4x16xf32>,
    } else {
    }
    %true_33 = arith.constant true
    %59 = arith.xori %56, %true_33 : i1
    %60 = arith.extui %59 : i1 to i32
    %c0_i32_34 = arith.constant 0 : i32
    %61 = arith.cmpi ne, %60, %c0_i32_34 : i32
    scf.if %61 {
      %cst_144 = arith.constant 0.000000e+00 : f32
      %246 = vector.broadcast %cst_144 : f32 to vector<4x16xf32>
      %c0_145 = arith.constant 0 : index
      %c81 = arith.constant 81 : index
      %247 = vector.load %arg6[%c0_145, %c81] : memref<8x290xf32, #tpu.memory_space<vmem>>, vector<4x16xf32>
      tpu.vector_store %arg6[%c0_145, %c81], %246 {strides = array<i32>} : memref<8x290xf32, #tpu.memory_space<vmem>>, vector<4x16xf32>,
    } else {
    }
    %c6_i32 = arith.constant 6 : i32
    %62 = arith.addi %1, %c6_i32 : i32
    %c0_i32_35 = arith.constant 0 : i32
    %63 = arith.cmpi sge, %62, %c0_i32_35 : i32
    %c16_i32_36 = arith.constant 16 : i32
    %64 = arith.cmpi slt, %62, %c16_i32_36 : i32
    %65 = arith.andi %63, %64 : i1
    %66 = arith.extui %65 : i1 to i32
    %c0_i32_37 = arith.constant 0 : i32
    %67 = arith.cmpi ne, %66, %c0_i32_37 : i32
    scf.if %67 {
      %c0_144 = arith.constant 0 : index
      %c0_145 = arith.constant 0 : index
      %246 = arith.index_cast %62 : i32 to index
      %c0_146 = arith.constant 0 : index
      %247 = vector.load %arg2[%c0_144, %c0_145, %246, %c0_146] : memref<1x4x16x16xf32, #tpu.memory_space<vmem>>, vector<1x4x1x16xf32>
      %248 = vector.shape_cast %247 : vector<1x4x1x16xf32> to vector<4x16xf32>
      %c0_147 = arith.constant 0 : index
      %c97 = arith.constant 97 : index
      %249 = vector.load %arg6[%c0_147, %c97] : memref<8x290xf32, #tpu.memory_space<vmem>>, vector<4x16xf32>
      tpu.vector_store %arg6[%c0_147, %c97], %248 {strides = array<i32>} : memref<8x290xf32, #tpu.memory_space<vmem>>, vector<4x16xf32>,
    } else {
    }
    %true_38 = arith.constant true
    %68 = arith.xori %65, %true_38 : i1
    %69 = arith.extui %68 : i1 to i32
    %c0_i32_39 = arith.constant 0 : i32
    %70 = arith.cmpi ne, %69, %c0_i32_39 : i32
    scf.if %70 {
      %cst_144 = arith.constant 0.000000e+00 : f32
      %246 = vector.broadcast %cst_144 : f32 to vector<4x16xf32>
      %c0_145 = arith.constant 0 : index
      %c97 = arith.constant 97 : index
      %247 = vector.load %arg6[%c0_145, %c97] : memref<8x290xf32, #tpu.memory_space<vmem>>, vector<4x16xf32>
      tpu.vector_store %arg6[%c0_145, %c97], %246 {strides = array<i32>} : memref<8x290xf32, #tpu.memory_space<vmem>>, vector<4x16xf32>,
    } else {
    }
    %c7_i32 = arith.constant 7 : i32
    %71 = arith.addi %1, %c7_i32 : i32
    %c0_i32_40 = arith.constant 0 : i32
    %72 = arith.cmpi sge, %71, %c0_i32_40 : i32
    %c16_i32_41 = arith.constant 16 : i32
    %73 = arith.cmpi slt, %71, %c16_i32_41 : i32
    %74 = arith.andi %72, %73 : i1
    %75 = arith.extui %74 : i1 to i32
    %c0_i32_42 = arith.constant 0 : i32
    %76 = arith.cmpi ne, %75, %c0_i32_42 : i32
    scf.if %76 {
      %c0_144 = arith.constant 0 : index
      %c0_145 = arith.constant 0 : index
      %246 = arith.index_cast %71 : i32 to index
      %c0_146 = arith.constant 0 : index
      %247 = vector.load %arg2[%c0_144, %c0_145, %246, %c0_146] : memref<1x4x16x16xf32, #tpu.memory_space<vmem>>, vector<1x4x1x16xf32>
      %248 = vector.shape_cast %247 : vector<1x4x1x16xf32> to vector<4x16xf32>
      %c0_147 = arith.constant 0 : index
      %c113 = arith.constant 113 : index
      %249 = vector.load %arg6[%c0_147, %c113] : memref<8x290xf32, #tpu.memory_space<vmem>>, vector<4x16xf32>
      tpu.vector_store %arg6[%c0_147, %c113], %248 {strides = array<i32>} : memref<8x290xf32, #tpu.memory_space<vmem>>, vector<4x16xf32>,
    } else {
    }
    %true_43 = arith.constant true
    %77 = arith.xori %74, %true_43 : i1
    %78 = arith.extui %77 : i1 to i32
    %c0_i32_44 = arith.constant 0 : i32
    %79 = arith.cmpi ne, %78, %c0_i32_44 : i32
    scf.if %79 {
      %cst_144 = arith.constant 0.000000e+00 : f32
      %246 = vector.broadcast %cst_144 : f32 to vector<4x16xf32>
      %c0_145 = arith.constant 0 : index
      %c113 = arith.constant 113 : index
      %247 = vector.load %arg6[%c0_145, %c113] : memref<8x290xf32, #tpu.memory_space<vmem>>, vector<4x16xf32>
      tpu.vector_store %arg6[%c0_145, %c113], %246 {strides = array<i32>} : memref<8x290xf32, #tpu.memory_space<vmem>>, vector<4x16xf32>,
    } else {
    }
    %c8_i32 = arith.constant 8 : i32
    %80 = arith.addi %1, %c8_i32 : i32
    %c0_i32_45 = arith.constant 0 : i32
    %81 = arith.cmpi sge, %80, %c0_i32_45 : i32
    %c16_i32_46 = arith.constant 16 : i32
    %82 = arith.cmpi slt, %80, %c16_i32_46 : i32
    %83 = arith.andi %81, %82 : i1
    %84 = arith.extui %83 : i1 to i32
    %c0_i32_47 = arith.constant 0 : i32
    %85 = arith.cmpi ne, %84, %c0_i32_47 : i32
    scf.if %85 {
      %c0_144 = arith.constant 0 : index
      %c0_145 = arith.constant 0 : index
      %246 = arith.index_cast %80 : i32 to index
      %c0_146 = arith.constant 0 : index
      %247 = vector.load %arg2[%c0_144, %c0_145, %246, %c0_146] : memref<1x4x16x16xf32, #tpu.memory_space<vmem>>, vector<1x4x1x16xf32>
      %248 = vector.shape_cast %247 : vector<1x4x1x16xf32> to vector<4x16xf32>
      %c0_147 = arith.constant 0 : index
      %c129 = arith.constant 129 : index
      %249 = vector.load %arg6[%c0_147, %c129] : memref<8x290xf32, #tpu.memory_space<vmem>>, vector<4x16xf32>
      tpu.vector_store %arg6[%c0_147, %c129], %248 {strides = array<i32>} : memref<8x290xf32, #tpu.memory_space<vmem>>, vector<4x16xf32>,
    } else {
    }
    %true_48 = arith.constant true
    %86 = arith.xori %83, %true_48 : i1
    %87 = arith.extui %86 : i1 to i32
    %c0_i32_49 = arith.constant 0 : i32
    %88 = arith.cmpi ne, %87, %c0_i32_49 : i32
    scf.if %88 {
      %cst_144 = arith.constant 0.000000e+00 : f32
      %246 = vector.broadcast %cst_144 : f32 to vector<4x16xf32>
      %c0_145 = arith.constant 0 : index
      %c129 = arith.constant 129 : index
      %247 = vector.load %arg6[%c0_145, %c129] : memref<8x290xf32, #tpu.memory_space<vmem>>, vector<4x16xf32>
      tpu.vector_store %arg6[%c0_145, %c129], %246 {strides = array<i32>} : memref<8x290xf32, #tpu.memory_space<vmem>>, vector<4x16xf32>,
    } else {
    }
    %c9_i32 = arith.constant 9 : i32
    %89 = arith.addi %1, %c9_i32 : i32
    %c0_i32_50 = arith.constant 0 : i32
    %90 = arith.cmpi sge, %89, %c0_i32_50 : i32
    %c16_i32_51 = arith.constant 16 : i32
    %91 = arith.cmpi slt, %89, %c16_i32_51 : i32
    %92 = arith.andi %90, %91 : i1
    %93 = arith.extui %92 : i1 to i32
    %c0_i32_52 = arith.constant 0 : i32
    %94 = arith.cmpi ne, %93, %c0_i32_52 : i32
    scf.if %94 {
      %c0_144 = arith.constant 0 : index
      %c0_145 = arith.constant 0 : index
      %246 = arith.index_cast %89 : i32 to index
      %c0_146 = arith.constant 0 : index
      %247 = vector.load %arg2[%c0_144, %c0_145, %246, %c0_146] : memref<1x4x16x16xf32, #tpu.memory_space<vmem>>, vector<1x4x1x16xf32>
      %248 = vector.shape_cast %247 : vector<1x4x1x16xf32> to vector<4x16xf32>
      %c0_147 = arith.constant 0 : index
      %c145 = arith.constant 145 : index
      %249 = vector.load %arg6[%c0_147, %c145] : memref<8x290xf32, #tpu.memory_space<vmem>>, vector<4x16xf32>
      tpu.vector_store %arg6[%c0_147, %c145], %248 {strides = array<i32>} : memref<8x290xf32, #tpu.memory_space<vmem>>, vector<4x16xf32>,
    } else {
    }
    %true_53 = arith.constant true
    %95 = arith.xori %92, %true_53 : i1
    %96 = arith.extui %95 : i1 to i32
    %c0_i32_54 = arith.constant 0 : i32
    %97 = arith.cmpi ne, %96, %c0_i32_54 : i32
    scf.if %97 {
      %cst_144 = arith.constant 0.000000e+00 : f32
      %246 = vector.broadcast %cst_144 : f32 to vector<4x16xf32>
      %c0_145 = arith.constant 0 : index
      %c145 = arith.constant 145 : index
      %247 = vector.load %arg6[%c0_145, %c145] : memref<8x290xf32, #tpu.memory_space<vmem>>, vector<4x16xf32>
      tpu.vector_store %arg6[%c0_145, %c145], %246 {strides = array<i32>} : memref<8x290xf32, #tpu.memory_space<vmem>>, vector<4x16xf32>,
    } else {
    }
    %c10_i32 = arith.constant 10 : i32
    %98 = arith.addi %1, %c10_i32 : i32
    %c0_i32_55 = arith.constant 0 : i32
    %99 = arith.cmpi sge, %98, %c0_i32_55 : i32
    %c16_i32_56 = arith.constant 16 : i32
    %100 = arith.cmpi slt, %98, %c16_i32_56 : i32
    %101 = arith.andi %99, %100 : i1
    %102 = arith.extui %101 : i1 to i32
    %c0_i32_57 = arith.constant 0 : i32
    %103 = arith.cmpi ne, %102, %c0_i32_57 : i32
    scf.if %103 {
      %c0_144 = arith.constant 0 : index
      %c0_145 = arith.constant 0 : index
      %246 = arith.index_cast %98 : i32 to index
      %c0_146 = arith.constant 0 : index
      %247 = vector.load %arg2[%c0_144, %c0_145, %246, %c0_146] : memref<1x4x16x16xf32, #tpu.memory_space<vmem>>, vector<1x4x1x16xf32>
      %248 = vector.shape_cast %247 : vector<1x4x1x16xf32> to vector<4x16xf32>
      %c0_147 = arith.constant 0 : index
      %c161 = arith.constant 161 : index
      %249 = vector.load %arg6[%c0_147, %c161] : memref<8x290xf32, #tpu.memory_space<vmem>>, vector<4x16xf32>
      tpu.vector_store %arg6[%c0_147, %c161], %248 {strides = array<i32>} : memref<8x290xf32, #tpu.memory_space<vmem>>, vector<4x16xf32>,
    } else {
    }
    %true_58 = arith.constant true
    %104 = arith.xori %101, %true_58 : i1
    %105 = arith.extui %104 : i1 to i32
    %c0_i32_59 = arith.constant 0 : i32
    %106 = arith.cmpi ne, %105, %c0_i32_59 : i32
    scf.if %106 {
      %cst_144 = arith.constant 0.000000e+00 : f32
      %246 = vector.broadcast %cst_144 : f32 to vector<4x16xf32>
      %c0_145 = arith.constant 0 : index
      %c161 = arith.constant 161 : index
      %247 = vector.load %arg6[%c0_145, %c161] : memref<8x290xf32, #tpu.memory_space<vmem>>, vector<4x16xf32>
      tpu.vector_store %arg6[%c0_145, %c161], %246 {strides = array<i32>} : memref<8x290xf32, #tpu.memory_space<vmem>>, vector<4x16xf32>,
    } else {
    }
    %c11_i32 = arith.constant 11 : i32
    %107 = arith.addi %1, %c11_i32 : i32
    %c0_i32_60 = arith.constant 0 : i32
    %108 = arith.cmpi sge, %107, %c0_i32_60 : i32
    %c16_i32_61 = arith.constant 16 : i32
    %109 = arith.cmpi slt, %107, %c16_i32_61 : i32
    %110 = arith.andi %108, %109 : i1
    %111 = arith.extui %110 : i1 to i32
    %c0_i32_62 = arith.constant 0 : i32
    %112 = arith.cmpi ne, %111, %c0_i32_62 : i32
    scf.if %112 {
      %c0_144 = arith.constant 0 : index
      %c0_145 = arith.constant 0 : index
      %246 = arith.index_cast %107 : i32 to index
      %c0_146 = arith.constant 0 : index
      %247 = vector.load %arg2[%c0_144, %c0_145, %246, %c0_146] : memref<1x4x16x16xf32, #tpu.memory_space<vmem>>, vector<1x4x1x16xf32>
      %248 = vector.shape_cast %247 : vector<1x4x1x16xf32> to vector<4x16xf32>
      %c0_147 = arith.constant 0 : index
      %c177 = arith.constant 177 : index
      %249 = vector.load %arg6[%c0_147, %c177] : memref<8x290xf32, #tpu.memory_space<vmem>>, vector<4x16xf32>
      tpu.vector_store %arg6[%c0_147, %c177], %248 {strides = array<i32>} : memref<8x290xf32, #tpu.memory_space<vmem>>, vector<4x16xf32>,
    } else {
    }
    %true_63 = arith.constant true
    %113 = arith.xori %110, %true_63 : i1
    %114 = arith.extui %113 : i1 to i32
    %c0_i32_64 = arith.constant 0 : i32
    %115 = arith.cmpi ne, %114, %c0_i32_64 : i32
    scf.if %115 {
      %cst_144 = arith.constant 0.000000e+00 : f32
      %246 = vector.broadcast %cst_144 : f32 to vector<4x16xf32>
      %c0_145 = arith.constant 0 : index
      %c177 = arith.constant 177 : index
      %247 = vector.load %arg6[%c0_145, %c177] : memref<8x290xf32, #tpu.memory_space<vmem>>, vector<4x16xf32>
      tpu.vector_store %arg6[%c0_145, %c177], %246 {strides = array<i32>} : memref<8x290xf32, #tpu.memory_space<vmem>>, vector<4x16xf32>,
    } else {
    }
    %c12_i32 = arith.constant 12 : i32
    %116 = arith.addi %1, %c12_i32 : i32
    %c0_i32_65 = arith.constant 0 : i32
    %117 = arith.cmpi sge, %116, %c0_i32_65 : i32
    %c16_i32_66 = arith.constant 16 : i32
    %118 = arith.cmpi slt, %116, %c16_i32_66 : i32
    %119 = arith.andi %117, %118 : i1
    %120 = arith.extui %119 : i1 to i32
    %c0_i32_67 = arith.constant 0 : i32
    %121 = arith.cmpi ne, %120, %c0_i32_67 : i32
    scf.if %121 {
      %c0_144 = arith.constant 0 : index
      %c0_145 = arith.constant 0 : index
      %246 = arith.index_cast %116 : i32 to index
      %c0_146 = arith.constant 0 : index
      %247 = vector.load %arg2[%c0_144, %c0_145, %246, %c0_146] : memref<1x4x16x16xf32, #tpu.memory_space<vmem>>, vector<1x4x1x16xf32>
      %248 = vector.shape_cast %247 : vector<1x4x1x16xf32> to vector<4x16xf32>
      %c0_147 = arith.constant 0 : index
      %c193 = arith.constant 193 : index
      %249 = vector.load %arg6[%c0_147, %c193] : memref<8x290xf32, #tpu.memory_space<vmem>>, vector<4x16xf32>
      tpu.vector_store %arg6[%c0_147, %c193], %248 {strides = array<i32>} : memref<8x290xf32, #tpu.memory_space<vmem>>, vector<4x16xf32>,
    } else {
    }
    %true_68 = arith.constant true
    %122 = arith.xori %119, %true_68 : i1
    %123 = arith.extui %122 : i1 to i32
    %c0_i32_69 = arith.constant 0 : i32
    %124 = arith.cmpi ne, %123, %c0_i32_69 : i32
    scf.if %124 {
      %cst_144 = arith.constant 0.000000e+00 : f32
      %246 = vector.broadcast %cst_144 : f32 to vector<4x16xf32>
      %c0_145 = arith.constant 0 : index
      %c193 = arith.constant 193 : index
      %247 = vector.load %arg6[%c0_145, %c193] : memref<8x290xf32, #tpu.memory_space<vmem>>, vector<4x16xf32>
      tpu.vector_store %arg6[%c0_145, %c193], %246 {strides = array<i32>} : memref<8x290xf32, #tpu.memory_space<vmem>>, vector<4x16xf32>,
    } else {
    }
    %c13_i32 = arith.constant 13 : i32
    %125 = arith.addi %1, %c13_i32 : i32
    %c0_i32_70 = arith.constant 0 : i32
    %126 = arith.cmpi sge, %125, %c0_i32_70 : i32
    %c16_i32_71 = arith.constant 16 : i32
    %127 = arith.cmpi slt, %125, %c16_i32_71 : i32
    %128 = arith.andi %126, %127 : i1
    %129 = arith.extui %128 : i1 to i32
    %c0_i32_72 = arith.constant 0 : i32
    %130 = arith.cmpi ne, %129, %c0_i32_72 : i32
    scf.if %130 {
      %c0_144 = arith.constant 0 : index
      %c0_145 = arith.constant 0 : index
      %246 = arith.index_cast %125 : i32 to index
      %c0_146 = arith.constant 0 : index
      %247 = vector.load %arg2[%c0_144, %c0_145, %246, %c0_146] : memref<1x4x16x16xf32, #tpu.memory_space<vmem>>, vector<1x4x1x16xf32>
      %248 = vector.shape_cast %247 : vector<1x4x1x16xf32> to vector<4x16xf32>
      %c0_147 = arith.constant 0 : index
      %c209 = arith.constant 209 : index
      %249 = vector.load %arg6[%c0_147, %c209] : memref<8x290xf32, #tpu.memory_space<vmem>>, vector<4x16xf32>
      tpu.vector_store %arg6[%c0_147, %c209], %248 {strides = array<i32>} : memref<8x290xf32, #tpu.memory_space<vmem>>, vector<4x16xf32>,
    } else {
    }
    %true_73 = arith.constant true
    %131 = arith.xori %128, %true_73 : i1
    %132 = arith.extui %131 : i1 to i32
    %c0_i32_74 = arith.constant 0 : i32
    %133 = arith.cmpi ne, %132, %c0_i32_74 : i32
    scf.if %133 {
      %cst_144 = arith.constant 0.000000e+00 : f32
      %246 = vector.broadcast %cst_144 : f32 to vector<4x16xf32>
      %c0_145 = arith.constant 0 : index
      %c209 = arith.constant 209 : index
      %247 = vector.load %arg6[%c0_145, %c209] : memref<8x290xf32, #tpu.memory_space<vmem>>, vector<4x16xf32>
      tpu.vector_store %arg6[%c0_145, %c209], %246 {strides = array<i32>} : memref<8x290xf32, #tpu.memory_space<vmem>>, vector<4x16xf32>,
    } else {
    }
    %c14_i32 = arith.constant 14 : i32
    %134 = arith.addi %1, %c14_i32 : i32
    %c0_i32_75 = arith.constant 0 : i32
    %135 = arith.cmpi sge, %134, %c0_i32_75 : i32
    %c16_i32_76 = arith.constant 16 : i32
    %136 = arith.cmpi slt, %134, %c16_i32_76 : i32
    %137 = arith.andi %135, %136 : i1
    %138 = arith.extui %137 : i1 to i32
    %c0_i32_77 = arith.constant 0 : i32
    %139 = arith.cmpi ne, %138, %c0_i32_77 : i32
    scf.if %139 {
      %c0_144 = arith.constant 0 : index
      %c0_145 = arith.constant 0 : index
      %246 = arith.index_cast %134 : i32 to index
      %c0_146 = arith.constant 0 : index
      %247 = vector.load %arg2[%c0_144, %c0_145, %246, %c0_146] : memref<1x4x16x16xf32, #tpu.memory_space<vmem>>, vector<1x4x1x16xf32>
      %248 = vector.shape_cast %247 : vector<1x4x1x16xf32> to vector<4x16xf32>
      %c0_147 = arith.constant 0 : index
      %c225 = arith.constant 225 : index
      %249 = vector.load %arg6[%c0_147, %c225] : memref<8x290xf32, #tpu.memory_space<vmem>>, vector<4x16xf32>
      tpu.vector_store %arg6[%c0_147, %c225], %248 {strides = array<i32>} : memref<8x290xf32, #tpu.memory_space<vmem>>, vector<4x16xf32>,
    } else {
    }
    %true_78 = arith.constant true
    %140 = arith.xori %137, %true_78 : i1
    %141 = arith.extui %140 : i1 to i32
    %c0_i32_79 = arith.constant 0 : i32
    %142 = arith.cmpi ne, %141, %c0_i32_79 : i32
    scf.if %142 {
      %cst_144 = arith.constant 0.000000e+00 : f32
      %246 = vector.broadcast %cst_144 : f32 to vector<4x16xf32>
      %c0_145 = arith.constant 0 : index
      %c225 = arith.constant 225 : index
      %247 = vector.load %arg6[%c0_145, %c225] : memref<8x290xf32, #tpu.memory_space<vmem>>, vector<4x16xf32>
      tpu.vector_store %arg6[%c0_145, %c225], %246 {strides = array<i32>} : memref<8x290xf32, #tpu.memory_space<vmem>>, vector<4x16xf32>,
    } else {
    }
    %c15_i32 = arith.constant 15 : i32
    %143 = arith.addi %1, %c15_i32 : i32
    %c0_i32_80 = arith.constant 0 : i32
    %144 = arith.cmpi sge, %143, %c0_i32_80 : i32
    %c16_i32_81 = arith.constant 16 : i32
    %145 = arith.cmpi slt, %143, %c16_i32_81 : i32
    %146 = arith.andi %144, %145 : i1
    %147 = arith.extui %146 : i1 to i32
    %c0_i32_82 = arith.constant 0 : i32
    %148 = arith.cmpi ne, %147, %c0_i32_82 : i32
    scf.if %148 {
      %c0_144 = arith.constant 0 : index
      %c0_145 = arith.constant 0 : index
      %246 = arith.index_cast %143 : i32 to index
      %c0_146 = arith.constant 0 : index
      %247 = vector.load %arg2[%c0_144, %c0_145, %246, %c0_146] : memref<1x4x16x16xf32, #tpu.memory_space<vmem>>, vector<1x4x1x16xf32>
      %248 = vector.shape_cast %247 : vector<1x4x1x16xf32> to vector<4x16xf32>
      %c0_147 = arith.constant 0 : index
      %c241 = arith.constant 241 : index
      %249 = vector.load %arg6[%c0_147, %c241] : memref<8x290xf32, #tpu.memory_space<vmem>>, vector<4x16xf32>
      tpu.vector_store %arg6[%c0_147, %c241], %248 {strides = array<i32>} : memref<8x290xf32, #tpu.memory_space<vmem>>, vector<4x16xf32>,
    } else {
    }
    %true_83 = arith.constant true
    %149 = arith.xori %146, %true_83 : i1
    %150 = arith.extui %149 : i1 to i32
    %c0_i32_84 = arith.constant 0 : i32
    %151 = arith.cmpi ne, %150, %c0_i32_84 : i32
    scf.if %151 {
      %cst_144 = arith.constant 0.000000e+00 : f32
      %246 = vector.broadcast %cst_144 : f32 to vector<4x16xf32>
      %c0_145 = arith.constant 0 : index
      %c241 = arith.constant 241 : index
      %247 = vector.load %arg6[%c0_145, %c241] : memref<8x290xf32, #tpu.memory_space<vmem>>, vector<4x16xf32>
      tpu.vector_store %arg6[%c0_145, %c241], %246 {strides = array<i32>} : memref<8x290xf32, #tpu.memory_space<vmem>>, vector<4x16xf32>,
    } else {
    }
    %c16_i32_85 = arith.constant 16 : i32
    %152 = arith.addi %1, %c16_i32_85 : i32
    %c0_i32_86 = arith.constant 0 : i32
    %153 = arith.cmpi sge, %152, %c0_i32_86 : i32
    %c16_i32_87 = arith.constant 16 : i32
    %154 = arith.cmpi slt, %152, %c16_i32_87 : i32
    %155 = arith.andi %153, %154 : i1
    %156 = arith.extui %155 : i1 to i32
    %c0_i32_88 = arith.constant 0 : i32
    %157 = arith.cmpi ne, %156, %c0_i32_88 : i32
    scf.if %157 {
      %c0_144 = arith.constant 0 : index
      %c0_145 = arith.constant 0 : index
      %246 = arith.index_cast %152 : i32 to index
      %c0_146 = arith.constant 0 : index
      %247 = vector.load %arg2[%c0_144, %c0_145, %246, %c0_146] : memref<1x4x16x16xf32, #tpu.memory_space<vmem>>, vector<1x4x1x16xf32>
      %248 = vector.shape_cast %247 : vector<1x4x1x16xf32> to vector<4x16xf32>
      %c0_147 = arith.constant 0 : index
      %c257 = arith.constant 257 : index
      %249 = vector.load %arg6[%c0_147, %c257] : memref<8x290xf32, #tpu.memory_space<vmem>>, vector<4x16xf32>
      tpu.vector_store %arg6[%c0_147, %c257], %248 {strides = array<i32>} : memref<8x290xf32, #tpu.memory_space<vmem>>, vector<4x16xf32>,
    } else {
    }
    %true_89 = arith.constant true
    %158 = arith.xori %155, %true_89 : i1
    %159 = arith.extui %158 : i1 to i32
    %c0_i32_90 = arith.constant 0 : i32
    %160 = arith.cmpi ne, %159, %c0_i32_90 : i32
    scf.if %160 {
      %cst_144 = arith.constant 0.000000e+00 : f32
      %246 = vector.broadcast %cst_144 : f32 to vector<4x16xf32>
      %c0_145 = arith.constant 0 : index
      %c257 = arith.constant 257 : index
      %247 = vector.load %arg6[%c0_145, %c257] : memref<8x290xf32, #tpu.memory_space<vmem>>, vector<4x16xf32>
      tpu.vector_store %arg6[%c0_145, %c257], %246 {strides = array<i32>} : memref<8x290xf32, #tpu.memory_space<vmem>>, vector<4x16xf32>,
    } else {
    }
    %c17_i32 = arith.constant 17 : i32
    %161 = arith.addi %1, %c17_i32 : i32
    %c0_i32_91 = arith.constant 0 : i32
    %162 = arith.cmpi sge, %161, %c0_i32_91 : i32
    %c16_i32_92 = arith.constant 16 : i32
    %163 = arith.cmpi slt, %161, %c16_i32_92 : i32
    %164 = arith.andi %162, %163 : i1
    %165 = arith.extui %164 : i1 to i32
    %c0_i32_93 = arith.constant 0 : i32
    %166 = arith.cmpi ne, %165, %c0_i32_93 : i32
    scf.if %166 {
      %c0_144 = arith.constant 0 : index
      %c0_145 = arith.constant 0 : index
      %246 = arith.index_cast %161 : i32 to index
      %c0_146 = arith.constant 0 : index
      %247 = vector.load %arg2[%c0_144, %c0_145, %246, %c0_146] : memref<1x4x16x16xf32, #tpu.memory_space<vmem>>, vector<1x4x1x16xf32>
      %248 = vector.shape_cast %247 : vector<1x4x1x16xf32> to vector<4x16xf32>
      %c0_147 = arith.constant 0 : index
      %c273 = arith.constant 273 : index
      %249 = vector.load %arg6[%c0_147, %c273] : memref<8x290xf32, #tpu.memory_space<vmem>>, vector<4x16xf32>
      tpu.vector_store %arg6[%c0_147, %c273], %248 {strides = array<i32>} : memref<8x290xf32, #tpu.memory_space<vmem>>, vector<4x16xf32>,
    } else {
    }
    %true_94 = arith.constant true
    %167 = arith.xori %164, %true_94 : i1
    %168 = arith.extui %167 : i1 to i32
    %c0_i32_95 = arith.constant 0 : i32
    %169 = arith.cmpi ne, %168, %c0_i32_95 : i32
    scf.if %169 {
      %cst_144 = arith.constant 0.000000e+00 : f32
      %246 = vector.broadcast %cst_144 : f32 to vector<4x16xf32>
      %c0_145 = arith.constant 0 : index
      %c273 = arith.constant 273 : index
      %247 = vector.load %arg6[%c0_145, %c273] : memref<8x290xf32, #tpu.memory_space<vmem>>, vector<4x16xf32>
      tpu.vector_store %arg6[%c0_145, %c273], %246 {strides = array<i32>} : memref<8x290xf32, #tpu.memory_space<vmem>>, vector<4x16xf32>,
    } else {
    }
    %170 = tpu.iota {dimensions = array<i32: 1>} : vector<1x256xi32>
    %c16_i32_96 = arith.constant 16 : i32
    %c0_i32_97 = arith.constant 0 : i32
    %171 = arith.cmpi eq, %c16_i32_96, %c0_i32_97 : i32
    %c1_i32_98 = arith.constant 1 : i32
    %172 = arith.select %171, %c1_i32_98, %c16_i32_96 : i32
    %173 = vector.broadcast %172 : i32 to vector<1x256xi32>
    %174 = arith.remsi %170, %173 : vector<1x256xi32>
    %c0_i32_99 = arith.constant 0 : i32
    %175 = vector.broadcast %c0_i32_99 : i32 to vector<1x256xi32>
    %176 = arith.cmpi ne, %174, %175 : vector<1x256xi32>
    %c0_i32_100 = arith.constant 0 : i32
    %177 = vector.broadcast %c0_i32_100 : i32 to vector<1x256xi32>
    %178 = arith.cmpi slt, %174, %177 : vector<1x256xi32>
    %c0_i32_101 = arith.constant 0 : i32
    %179 = arith.cmpi slt, %172, %c0_i32_101 : i32
    %180 = vector.broadcast %179 : i1 to vector<1x256xi1>
    %181 = vector.broadcast %180 : vector<1x256xi1> to vector<1x256xi1>
    %182 = arith.xori %178, %181 : vector<1x256xi1>
    %183 = arith.andi %182, %176 : vector<1x256xi1>
    %184 = vector.broadcast %172 : i32 to vector<1x256xi32>
    %185 = arith.addi %174, %184 : vector<1x256xi32>
    %186 = arith.select %183, %185, %174 : vector<1x256xi1>, vector<1x256xi32>
    %c1_i32_102 = arith.constant 1 : i32
    %187 = vector.broadcast %c1_i32_102 : i32 to vector<1x256xi32>
    %188 = arith.cmpi sge, %186, %187 : vector<1x256xi32>
    %c17_i32_103 = arith.constant 17 : i32
    %189 = vector.broadcast %c17_i32_103 : i32 to vector<1x256xi32>
    %190 = arith.cmpi slt, %186, %189 : vector<1x256xi32>
    %191 = arith.andi %188, %190 : vector<1x256xi1>
    %192 = vector.shape_cast %191 : vector<1x256xi1> to vector<1x256xi1>
    %193 = vector.broadcast %192 : vector<1x256xi1> to vector<8x256xi1>
    %c-1_i32 = arith.constant -1 : i32
    %194 = vector.broadcast %c-1_i32 : i32 to vector<1x256xi32>
    %195 = arith.cmpi sge, %186, %194 : vector<1x256xi32>
    %c15_i32_104 = arith.constant 15 : i32
    %196 = vector.broadcast %c15_i32_104 : i32 to vector<1x256xi32>
    %197 = arith.cmpi slt, %186, %196 : vector<1x256xi32>
    %198 = arith.andi %195, %197 : vector<1x256xi1>
    %199 = vector.shape_cast %198 : vector<1x256xi1> to vector<1x256xi1>
    %200 = vector.broadcast %199 : vector<1x256xi1> to vector<8x256xi1>
    %c0_105 = arith.constant 0 : index
    %c0_106 = arith.constant 0 : index
    %201 = vector.load %arg6[%c0_105, %c0_106] : memref<8x290xf32, #tpu.memory_space<vmem>>, vector<8x256xf32>
    %cst_107 = arith.constant 0.000000e+00 : f32
    %202 = vector.broadcast %cst_107 : f32 to vector<8x256xf32>
    %203 = arith.select %193, %201, %202 : vector<8x256xi1>, vector<8x256xf32>
    %c0_108 = arith.constant 0 : index
    %c0_109 = arith.constant 0 : index
    %204 = vector.load %arg7[%c0_108, %c0_109] : memref<72x256xf32, #tpu.memory_space<vmem>>, vector<8x256xf32>
    tpu.vector_store %arg7[%c0_108, %c0_109], %203 {strides = array<i32>} : memref<72x256xf32, #tpu.memory_space<vmem>>, vector<8x256xf32>,
    %c0_110 = arith.constant 0 : index
    %c1 = arith.constant 1 : index
    %205 = vector.load %arg6[%c0_110, %c1] : memref<8x290xf32, #tpu.memory_space<vmem>>, vector<8x256xf32>
    %c8 = arith.constant 8 : index
    %c0_111 = arith.constant 0 : index
    %206 = vector.load %arg7[%c8, %c0_111] : memref<72x256xf32, #tpu.memory_space<vmem>>, vector<8x256xf32>
    tpu.vector_store %arg7[%c8, %c0_111], %205 {strides = array<i32>} : memref<72x256xf32, #tpu.memory_space<vmem>>, vector<8x256xf32>,
    %c0_112 = arith.constant 0 : index
    %c2 = arith.constant 2 : index
    %207 = vector.load %arg6[%c0_112, %c2] : memref<8x290xf32, #tpu.memory_space<vmem>>, vector<8x256xf32>
    %cst_113 = arith.constant 0.000000e+00 : f32
    %208 = vector.broadcast %cst_113 : f32 to vector<8x256xf32>
    %209 = arith.select %200, %207, %208 : vector<8x256xi1>, vector<8x256xf32>
    %c16 = arith.constant 16 : index
    %c0_114 = arith.constant 0 : index
    %210 = vector.load %arg7[%c16, %c0_114] : memref<72x256xf32, #tpu.memory_space<vmem>>, vector<8x256xf32>
    tpu.vector_store %arg7[%c16, %c0_114], %209 {strides = array<i32>} : memref<72x256xf32, #tpu.memory_space<vmem>>, vector<8x256xf32>,
    %c0_115 = arith.constant 0 : index
    %c16_116 = arith.constant 16 : index
    %211 = vector.load %arg6[%c0_115, %c16_116] : memref<8x290xf32, #tpu.memory_space<vmem>>, vector<8x256xf32>
    %cst_117 = arith.constant 0.000000e+00 : f32
    %212 = vector.broadcast %cst_117 : f32 to vector<8x256xf32>
    %213 = arith.select %193, %211, %212 : vector<8x256xi1>, vector<8x256xf32>
    %c24 = arith.constant 24 : index
    %c0_118 = arith.constant 0 : index
    %214 = vector.load %arg7[%c24, %c0_118] : memref<72x256xf32, #tpu.memory_space<vmem>>, vector<8x256xf32>
    tpu.vector_store %arg7[%c24, %c0_118], %213 {strides = array<i32>} : memref<72x256xf32, #tpu.memory_space<vmem>>, vector<8x256xf32>,
    %c0_119 = arith.constant 0 : index
    %c17 = arith.constant 17 : index
    %215 = vector.load %arg6[%c0_119, %c17] : memref<8x290xf32, #tpu.memory_space<vmem>>, vector<8x256xf32>
    %c32 = arith.constant 32 : index
    %c0_120 = arith.constant 0 : index
    %216 = vector.load %arg7[%c32, %c0_120] : memref<72x256xf32, #tpu.memory_space<vmem>>, vector<8x256xf32>
    tpu.vector_store %arg7[%c32, %c0_120], %215 {strides = array<i32>} : memref<72x256xf32, #tpu.memory_space<vmem>>, vector<8x256xf32>,
    %c0_121 = arith.constant 0 : index
    %c18 = arith.constant 18 : index
    %217 = vector.load %arg6[%c0_121, %c18] : memref<8x290xf32, #tpu.memory_space<vmem>>, vector<8x256xf32>
    %cst_122 = arith.constant 0.000000e+00 : f32
    %218 = vector.broadcast %cst_122 : f32 to vector<8x256xf32>
    %219 = arith.select %200, %217, %218 : vector<8x256xi1>, vector<8x256xf32>
    %c40 = arith.constant 40 : index
    %c0_123 = arith.constant 0 : index
    %220 = vector.load %arg7[%c40, %c0_123] : memref<72x256xf32, #tpu.memory_space<vmem>>, vector<8x256xf32>
    tpu.vector_store %arg7[%c40, %c0_123], %219 {strides = array<i32>} : memref<72x256xf32, #tpu.memory_space<vmem>>, vector<8x256xf32>,
    %c0_124 = arith.constant 0 : index
    %c32_125 = arith.constant 32 : index
    %221 = vector.load %arg6[%c0_124, %c32_125] : memref<8x290xf32, #tpu.memory_space<vmem>>, vector<8x256xf32>
    %cst_126 = arith.constant 0.000000e+00 : f32
    %222 = vector.broadcast %cst_126 : f32 to vector<8x256xf32>
    %223 = arith.select %193, %221, %222 : vector<8x256xi1>, vector<8x256xf32>
    %c48 = arith.constant 48 : index
    %c0_127 = arith.constant 0 : index
    %224 = vector.load %arg7[%c48, %c0_127] : memref<72x256xf32, #tpu.memory_space<vmem>>, vector<8x256xf32>
    tpu.vector_store %arg7[%c48, %c0_127], %223 {strides = array<i32>} : memref<72x256xf32, #tpu.memory_space<vmem>>, vector<8x256xf32>,
    %c0_128 = arith.constant 0 : index
    %c33 = arith.constant 33 : index
    %225 = vector.load %arg6[%c0_128, %c33] : memref<8x290xf32, #tpu.memory_space<vmem>>, vector<8x256xf32>
    %c56 = arith.constant 56 : index
    %c0_129 = arith.constant 0 : index
    %226 = vector.load %arg7[%c56, %c0_129] : memref<72x256xf32, #tpu.memory_space<vmem>>, vector<8x256xf32>
    tpu.vector_store %arg7[%c56, %c0_129], %225 {strides = array<i32>} : memref<72x256xf32, #tpu.memory_space<vmem>>, vector<8x256xf32>,
    %c0_130 = arith.constant 0 : index
    %c34 = arith.constant 34 : index
    %227 = vector.load %arg6[%c0_130, %c34] : memref<8x290xf32, #tpu.memory_space<vmem>>, vector<8x256xf32>
    %cst_131 = arith.constant 0.000000e+00 : f32
    %228 = vector.broadcast %cst_131 : f32 to vector<8x256xf32>
    %229 = arith.select %200, %227, %228 : vector<8x256xi1>, vector<8x256xf32>
    %c64 = arith.constant 64 : index
    %c0_132 = arith.constant 0 : index
    %230 = vector.load %arg7[%c64, %c0_132] : memref<72x256xf32, #tpu.memory_space<vmem>>, vector<8x256xf32>
    tpu.vector_store %arg7[%c64, %c0_132], %229 {strides = array<i32>} : memref<72x256xf32, #tpu.memory_space<vmem>>, vector<8x256xf32>,
    %c0_133 = arith.constant 0 : index
    %c0_134 = arith.constant 0 : index
    %231 = vector.load %arg3[%c0_133, %c0_134] : memref<8x72xf32, #tpu.memory_space<vmem>>, vector<8x72xf32>
    %c0_135 = arith.constant 0 : index
    %c0_136 = arith.constant 0 : index
    %232 = vector.load %arg7[%c0_135, %c0_136] : memref<72x256xf32, #tpu.memory_space<vmem>>, vector<72x256xf32>
    %cst_137 = arith.constant dense<0.000000e+00> : vector<8x256xf32>
    %233 = tpu.matmul %231, %232, %cst_137 {dimension_numbers = #tpu.dot_dimension_numbers<[1], [0], [0], [1], [0, 0, 1, 1], [], []>} : vector<8x72xf32>, vector<72x256xf32>, vector<8x256xf32> -> vector<8x256xf32>
    %c0_138 = arith.constant 0 : index
    %c0_139 = arith.constant 0 : index
    %234 = vector.load %arg4[%c0_138, %c0_139] : memref<8x1xf32, #tpu.memory_space<vmem>>, vector<8x1xf32>
    %235 = vector.broadcast %234 : vector<8x1xf32> to vector<8x256xf32>
    %236 = arith.addf %233, %235 : vector<8x256xf32>
    %237 = arith.negf %236 : vector<8x256xf32>
    %238 = math.exp %237 : vector<8x256xf32>
    %cst_140 = arith.constant 1.000000e+00 : f32
    %239 = vector.broadcast %cst_140 : f32 to vector<8x256xf32>
    %240 = arith.addf %239, %238 : vector<8x256xf32>
    %241 = arith.divf %239, %240 : vector<8x256xf32>
    %242 = arith.mulf %236, %241 : vector<8x256xf32>
    %c0_141 = arith.constant 0 : index
    %c0_142 = arith.constant 0 : index
    %c0_143 = arith.constant 0 : index
    %243 = vector.load %arg5[%c0_141, %c0_142, %c0_143] : memref<1x8x256xf32, #tpu.memory_space<vmem>>, vector<1x8x256xf32>
    %244 = vector.shape_cast %243 : vector<1x8x256xf32> to vector<8x256xf32>
    %245 = vector.shape_cast %242 : vector<8x256xf32> to vector<1x8x256xf32>
    tpu.vector_store %arg5[%c0_141, %c0_142, %c0_143], %245 {strides = array<i32>} : memref<1x8x256xf32, #tpu.memory_space<vmem>>, vector<1x8x256xf32>,
    return
  }
  func.func @transform_0(%arg0: i32, %arg1: i32) -> (i32, i32, i32, i32) {
    %c0_i32 = arith.constant 0 : i32
    %c0_i32_0 = arith.constant 0 : i32
    %c0_i32_1 = arith.constant 0 : i32
    %c0_i32_2 = arith.constant 0 : i32
    return %arg0, %c0_i32, %c0_i32_0, %c0_i32_1 : i32, i32, i32, i32
  }
  func.func @transform_1(%arg0: i32, %arg1: i32) -> (i32, i32) {
    %c0_i32 = arith.constant 0 : i32
    %c0_i32_0 = arith.constant 0 : i32
    %c0_i32_1 = arith.constant 0 : i32
    return %c0_i32, %c0_i32_0 : i32, i32
  }
  func.func @transform_2(%arg0: i32, %arg1: i32) -> (i32, i32) {
    %c0_i32 = arith.constant 0 : i32
    %c0_i32_0 = arith.constant 0 : i32
    %c0_i32_1 = arith.constant 0 : i32
    return %c0_i32, %c0_i32_0 : i32, i32
  }
  func.func @transform_3(%arg0: i32, %arg1: i32) -> (i32, i32, i32) {
    %c0_i32 = arith.constant 0 : i32
    %c0_i32_0 = arith.constant 0 : i32
    return %arg0, %c0_i32, %arg1 : i32, i32, i32
  }
}

</mosaic_0001>

<llo_original>
// kernel: tpu_custom_call.1
$region0: #{tpu_custom_call.1}
  #allocation0 [shape = 'u32[]', space=smem, size = 0x4, offset = 0x4, fixed_abs, tag = 'smem constant byte address 0x4 - core index']
  #allocation1 [shape = 'u32[144,128]{1,0:T(1,128)}', space=vmem, size = 0x12000, scoped, tag = 'internal scratch']
  #allocation2 [shape = 'f32[8,290]{1,0:T(8,128)}', space=vmem, size = 0x3000, scoped, tag = 'scratch operand']
  #allocation3 [shape = 'f32[72,256]{1,0:T(8,128)}', space=vmem, size = 0x12000, scoped, tag = 'scratch operand']
  %s0 = inlined_call_operand.hbm [shape: f32[2,4,16,16], index: 0, kind: input, shape index: {}]
  %s1 = inlined_call_operand.vmem [shape: f32[8,72], index: 1, kind: input, shape index: {}]
  %s2 = inlined_call_operand.vmem [shape: f32[8,1], index: 2, kind: input, shape index: {}]
  %s3 = inlined_call_operand.hbm [shape: f32[2,8,256], index: 3, kind: output, shape index: {}]
  %s4 = sld [smem:[#allocation0]]
  $region193: #{tpu_custom_call.1} parent=0
    _
  %s6 = ssub.s32 1, %s4
  %s7 = scalar_select 0, %s6, %s4
  $region1: #{tpu_custom_call.1} parent=0
    #allocation4 [shape = 'u8[65536]{0}', space=vmem, size = 0x10000, scoped, tag = 'input window, operand 0']
    #allocation5 [shape = 's32[2]{0}', space=sflag, size = 0x8, scoped, tag = 'scoped memory for tpu_custom_call.1']
    #allocation6 [shape = 's32[2]{0}', space=sflag, size = 0x8, scoped, tag = 'scoped memory for tpu_custom_call.1']
    #allocation7 [shape = 'u8[16384]{0}', space=vmem, size = 0x4000, scoped, tag = 'output window, operand 0']
    %8 = vsyncpa [#allocation5], 0
    %s9 = scalar_lea.sflag [#allocation5], 1
    %10 = vsyncpa %s9, 0
    %11 = vsyncpa [#allocation6], 0
    %s12 = scalar_lea.sflag [#allocation6], 1
    %13 = vsyncpa %s12, 0
    loop: start=0, step=1, limit=4
    $region2: #{tpu_custom_call.1} parent=1 // loop_pre_header
      _
    $region3: #{tpu_custom_call.1} parent=1 // loop_header
      %s15 = sphi 0, %s19
      %p16 = scmp.ge.s32.totalorder %s15, 4
      %s22 = sphi 0, %s34
      %s23 = sphi 0, %s30
      %s24 = sphi 0, %s22
      %s25 = sphi 0, %s23
      %s26 = sphi 0, %s24
      %s27 = sphi 0, %s25
      %s37 = sphi 0, %s39
      %s40 = sphi 0, %s37
      %s41 = sphi 0, %s40
      %s57 = sphi 0, %s41
      %s61 = sphi 0, %s61
      %s63 = sphi 0, %s61
      %s64 = sphi 0, %s63
      %s78 = sphi 0, %s64
      %s82 = sphi 0, %s82
      %s84 = sphi 0, %s82
      %s85 = sphi 0, %s84
      %s99 = sphi 0, %s85
      %s107 = sphi 0, %s109
      %s110 = sphi 0, %s107
      %s111 = sphi 0, %s110
      %s127 = sphi 0, %s111
    $region4: #{tpu_custom_call.1} parent=1 // loop_header_branch
      %18 = sbr.rel (%p16) target = $region8
    $region5: #{tpu_custom_call.1} parent=1 // loop_body
      %s20 = ssub.s32 %s15, 1
      %s21 = ssub.s32 %s15, 2
      %s28 = sadd.s32 1, %s23
      %p29 = scmp.ge.s32.totalorder %s28, 1
      %s30 = scalar_select %p29, 0, %s28
      %s31 = sadd.s32 1, %s22
      %s32 = scalar_select %p29, %s31, %s22
      %p33 = scmp.ge.s32.totalorder %s32, 2
      %s34 = scalar_select %p33, 0, %s32
      %s35 = ssub.s32 %s22, %s34
      %p36 = scmp.eq.s32.totalorder %s35, 0
      %s38 = sadd.s32 %s37, 1
      %s39 = scalar_select %p36, %s37, %s38
      %p42 = pneg %p36
      %p43 = scmp.eq.s32.totalorder %s15, 1
      %p44 = por %p42, %p43
      %p45 = scmp.ne.s32.totalorder %s37, %s40
      %p46 = scmp.eq.s32.totalorder %s15, 0
      %p47 = por %p45, %p46
      %p48 = scmp.ne.s32.totalorder %s37, %s40
      %p49 = scmp.eq.s32.totalorder %s20, 1
      %p50 = por %p48, %p49
      %p51 = scmp.ne.s32.totalorder %s40, %s41
      %p52 = scmp.eq.s32.totalorder %s20, 0
      %p53 = por %p51, %p52
      %p54 = scmp.ne.s32.totalorder %s40, %s41
      %p55 = scmp.eq.s32.totalorder %s21, 1
      %p56 = por %p54, %p55
      %p58 = scmp.ne.s32.totalorder %s41, %s57
      %p59 = scmp.eq.s32.totalorder %s21, 0
      %p60 = por %p58, %p59
      %s62 = sadd.s32 %s61, 1
      %p65 = scmp.eq.s32.totalorder %s15, 1
      %p66 = scmp.ne.s32.totalorder %s61, %s63
      %p67 = scmp.eq.s32.totalorder %s15, 0
      %p68 = por %p66, %p67
      %p69 = scmp.ne.s32.totalorder %s61, %s63
      %p70 = scmp.eq.s32.totalorder %s20, 1
      %p71 = por %p69, %p70
      %p72 = scmp.ne.s32.totalorder %s63, %s64
      %p73 = scmp.eq.s32.totalorder %s20, 0
      %p74 = por %p72, %p73
      %p75 = scmp.ne.s32.totalorder %s63, %s64
      %p76 = scmp.eq.s32.totalorder %s21, 1
      %p77 = por %p75, %p76
      %p79 = scmp.ne.s32.totalorder %s64, %s78
      %p80 = scmp.eq.s32.totalorder %s21, 0
      %p81 = por %p79, %p80
      %s83 = sadd.s32 %s82, 1
      %p86 = scmp.eq.s32.totalorder %s15, 1
      %p87 = scmp.ne.s32.totalorder %s82, %s84
      %p88 = scmp.eq.s32.totalorder %s15, 0
      %p89 = por %p87, %p88
      %p90 = scmp.ne.s32.totalorder %s82, %s84
      %p91 = scmp.eq.s32.totalorder %s20, 1
      %p92 = por %p90, %p91
      %p93 = scmp.ne.s32.totalorder %s84, %s85
      %p94 = scmp.eq.s32.totalorder %s20, 0
      %p95 = por %p93, %p94
      %p96 = scmp.ne.s32.totalorder %s84, %s85
      %p97 = scmp.eq.s32.totalorder %s21, 1
      %p98 = por %p96, %p97
      %p100 = scmp.ne.s32.totalorder %s85, %s99
      %p101 = scmp.eq.s32.totalorder %s21, 0
      %p102 = por %p100, %p101
      %s103 = ssub.s32 %s22, %s34
      %s104 = ssub.s32 %s23, %s30
      %s105 = sor.u32 %s103, %s104
      %p106 = scmp.eq.s32.totalorder %s105, 0
      %s108 = sadd.s32 %s107, 1
      %s109 = scalar_select %p106, %s107, %s108
      %p112 = pneg %p106
      %p113 = scmp.eq.s32.totalorder %s15, 1
      %p114 = por %p112, %p113
      %p115 = scmp.ne.s32.totalorder %s107, %s110
      %p116 = scmp.eq.s32.totalorder %s15, 0
      %p117 = por %p115, %p116
      %p118 = scmp.ne.s32.totalorder %s107, %s110
      %p119 = scmp.eq.s32.totalorder %s20, 1
      %p120 = por %p118, %p119
      %p121 = scmp.ne.s32.totalorder %s110, %s111
      %p122 = scmp.eq.s32.totalorder %s20, 0
      %p123 = por %p121, %p122
      %p124 = scmp.ne.s32.totalorder %s110, %s111
      %p125 = scmp.eq.s32.totalorder %s21, 1
      %p126 = por %p124, %p125
      %p128 = scmp.ne.s32.totalorder %s111, %s127
      %p129 = scmp.eq.s32.totalorder %s21, 0
      %p130 = por %p128, %p129
      %p131 = scmp.le.s32.totalorder 1, %s15
      %p132 = scmp.lt.s32.totalorder %s15, 3
      %p133 = pnand %p131, %p132
      %p134 = pneg %p133
      // Predicated region
      $region9: #{tpu_custom_call.1} parent=5 // pred_check
        _
      $region10: #{tpu_custom_call.1} parent=5 // pred_check_branch
        %136 = sbr.rel (%p133) target = $region12
      $region11: #{tpu_custom_call.1} parent=5 // pred_region
        %s137 = ssub.s32 %s15, 1
        // Predicated region
        $region13: #{tpu_custom_call.1} parent=11 // pred_check
          %p138 = pneg %p74
        $region14: #{tpu_custom_call.1} parent=11 // pred_check_branch
          %140 = sbr.rel (%p138) target = $region16
        $region15: #{tpu_custom_call.1} parent=11 // pred_region
          _
        $region16: #{tpu_custom_call.1} parent=11 // pred_fallthru
          _
        // Predicated region
        $region17: #{tpu_custom_call.1} parent=11 // pred_check
          %p141 = pneg %p95
        $region18: #{tpu_custom_call.1} parent=11 // pred_check_branch
          %143 = sbr.rel (%p141) target = $region20
        $region19: #{tpu_custom_call.1} parent=11 // pred_region
          _
        $region20: #{tpu_custom_call.1} parent=11 // pred_fallthru
          _
      $region12: #{tpu_custom_call.1} parent=5 // pred_fallthru
        _
      %p144 = scmp.lt.s32.totalorder %s15, 2
      // Predicated region
      $region21: #{tpu_custom_call.1} parent=5 // pred_check
        %p145 = pneg %p144
      $region22: #{tpu_custom_call.1} parent=5 // pred_check_branch
        %147 = sbr.rel (%p145) target = $region24
      $region23: #{tpu_custom_call.1} parent=5 // pred_region
        // Predicated region
        $region25: #{tpu_custom_call.1} parent=23 // pred_check
          %p148 = pneg %p47
        $region26: #{tpu_custom_call.1} parent=23 // pred_check_branch
          %150 = sbr.rel (%p148) target = $region28
        $region27: #{tpu_custom_call.1} parent=23 // pred_region
          %s151 = sand.u32 %s37, 1
          %s152 = scalar_lea.sflag [#allocation5], %s151
          %s153 = sand.u32 %s37, 1
          %s154 = smul.addr %s153, 64
          %s155 = scalar_lea.vmem [#allocation4], %s154
          %s157 = ssub.s32 1024, 1024
          %158 = vsyncadd %s152, %s157
          %s159 = smul.addr %s22, 8
          %s160 = smul.addr %s159, 128
          %s161 = scalar_lea.hbm %s0, %s160
          %s162 = sshll.u32 %s155, 4
          %s163 = int_to_ptr.vmem [resolvable:$true] %s162
          %168 = dma.hbm_to_vmem [thread:$0]  %s161, 1024, %s163, %s152, 128, 128, 8
        $region28: #{tpu_custom_call.1} parent=23 // pred_fallthru
          _
      $region24: #{tpu_custom_call.1} parent=5 // pred_fallthru
        _
      %p169 = scmp.le.s32.totalorder 1, %s15
      %p170 = scmp.lt.s32.totalorder %s15, 3
      %p171 = pnand %p169, %p170
      %p172 = pneg %p171
      // Predicated region
      $region29: #{tpu_custom_call.1} parent=5 // pred_check
        _
      $region30: #{tpu_custom_call.1} parent=5 // pred_check_branch
        %174 = sbr.rel (%p171) target = $region32
      $region31: #{tpu_custom_call.1} parent=5 // pred_region
        %s175 = ssub.s32 %s15, 1
        %s176 = sand.u32 %s40, 1
        %s177 = scalar_lea.sflag [#allocation5], %s176
        %s178 = sand.u32 %s40, 1
        %s179 = smul.addr %s178, 64
        %s180 = scalar_lea.vmem [#allocation4], %s179
        // Predicated region
        $region33: #{tpu_custom_call.1} parent=31 // pred_check
          %p181 = pneg %p53
        $region34: #{tpu_custom_call.1} parent=31 // pred_check_branch
          %183 = sbr.rel (%p181) target = $region36
        $region35: #{tpu_custom_call.1} parent=31 // pred_region
          %184 = dma.done %s177, 1024
        $region36: #{tpu_custom_call.1} parent=31 // pred_fallthru
          _
        %s185 = sand.u32 %s40, 1
        %s186 = scalar_lea.sflag [#allocation5], %s185
        %s187 = sand.u32 %s40, 1
        %s188 = smul.addr %s187, 64
        %s189 = scalar_lea.vmem [#allocation4], %s188
        %p190 = pneg %p53
        %p191 = pneg %p50
        %p192 = pneg %p74
        %p193 = pneg %p71
        %p194 = pneg %p95
        %p195 = pneg %p92
        %p196 = pneg %p123
        %p197 = pneg %p120
        %s198 = sand.u32 %s110, 1
        %s199 = scalar_lea.sflag [#allocation6], %s198
        %s200 = sand.u32 %s110, 1
        %s201 = smul.addr %s200, 16
        %s202 = scalar_lea.vmem [#allocation7], %s201
        %s203 = smul.u32 2, %s25
        %s204 = smul.u32 %s25, 16
        %s205 = ssub.s32 %s204, 1
        %206 = vst [vmem:[#allocation2] sm:$0xf0] 0.0
        %207 = vst [vmem:[#allocation2 + $0x8] sm:$0xf0] 0.0
        %vm208 = vcmask 277508
        %209 = vst.msk [vmem:[#allocation2 + $0x10] sm:$0xf0] %vm208, 0.0
        %vm210 = vcmask 3072
        %211 = vst.msk [vmem:[#allocation2] sm:$0xf] %vm210, 0.0
        %vm212 = vcmask 273672
        %213 = vst.msk [vmem:[#allocation2 + $0x10] sm:$0xf] %vm212, 0.0
        %p214 = scmp.ge.s32.totalorder %s205, 0
        %p215 = scmp.lt.s32.totalorder %s205, 16
        %p216 = pnand %p214, %p215
        %p217 = pneg %p216
        // Predicated region
        $region37: #{tpu_custom_call.1} parent=31 // pred_check
          _
        $region38: #{tpu_custom_call.1} parent=31 // pred_check_branch
          %219 = sbr.rel (%p216) target = $region40
        $region39: #{tpu_custom_call.1} parent=31 // pred_region
          %s220 = scalar_lea.vmem %s180, %s205 [#allocation4]
          %v221 = vld [vmem:[%s220] sm:$0x1]
          %v222 = vld [vmem:[%s220 + $0x10] sm:$0x1]
          %v223 = vld [vmem:[%s220 + $0x20] sm:$0x1]
          %v224 = vld [vmem:[%s220 + $0x30] sm:$0x1]
          %v229 = vrot.slane %v222, 7
          %vm230 = vcmask 1041409
          %v231 = vsel %vm230, %v229, %v221
          %v232 = vrot.slane %v223, 6
          %vm233 = vcmask 1042434
          %v234 = vsel %vm233, %v232, %v231
          %v235 = vrot.slane %v224, 5
          %vm236 = vcmask 1043459
          %v237 = vsel %vm236, %v235, %v234
          %238 = vrot.lane.b32.xlu0 %v237, 1
          %v239 = vpop.permute.xlu0 %238
          %vm241 = vcmask 134152
          %242 = vst.msk [vmem:[#allocation2] sm:$0xf] %vm241, %v239
        $region40: #{tpu_custom_call.1} parent=31 // pred_fallthru
          _
        %p243 = pneg %p217
        // Predicated region
        $region41: #{tpu_custom_call.1} parent=31 // pred_check
          _
        $region42: #{tpu_custom_call.1} parent=31 // pred_check_branch
          %245 = sbr.rel (%p217) target = $region44
        $region43: #{tpu_custom_call.1} parent=31 // pred_region
          %vm246 = vcmask 134152
          %247 = vst.msk [vmem:[#allocation2] sm:$0xf] %vm246, 0.0
        $region44: #{tpu_custom_call.1} parent=31 // pred_fallthru
          _
        %p248 = scmp.ge.s32.totalorder %s204, 0
        %p249 = scmp.lt.s32.totalorder %s204, 16
        %p250 = pnand %p248, %p249
        %p251 = pneg %p250
        // Predicated region
        $region45: #{tpu_custom_call.1} parent=31 // pred_check
          _
        $region46: #{tpu_custom_call.1} parent=31 // pred_check_branch
          %253 = sbr.rel (%p250) target = $region48
        $region47: #{tpu_custom_call.1} parent=31 // pred_region
          %s254 = scalar_lea.vmem %s180, %s204 [#allocation4]
          %v255 = vld [vmem:[%s254] sm:$0x1]
          %v256 = vld [vmem:[%s254 + $0x10] sm:$0x1]
          %v257 = vld [vmem:[%s254 + $0x20] sm:$0x1]
          %v258 = vld [vmem:[%s254 + $0x30] sm:$0x1]
          %v263 = vrot.slane %v256, 7
          %vm264 = vcmask 1041409
          %v265 = vsel %vm264, %v263, %v255
          %v266 = vrot.slane %v257, 6
          %vm267 = vcmask 1042434
          %v268 = vsel %vm267, %v266, %v265
          %v269 = vrot.slane %v258, 5
          %vm270 = vcmask 1043459
          %v271 = vsel %vm270, %v269, %v268
          %272 = vrot.lane.b32.xlu0 %v271, 17
          %v273 = vpop.permute.xlu0 %272
          %vm275 = vcmask 265352
          %276 = vst.msk [vmem:[#allocation2] sm:$0xf] %vm275, %v273
        $region48: #{tpu_custom_call.1} parent=31 // pred_fallthru
          _
        %p277 = pneg %p251
        // Predicated region
        $region49: #{tpu_custom_call.1} parent=31 // pred_check
          _
        $region50: #{tpu_custom_call.1} parent=31 // pred_check_branch
          %279 = sbr.rel (%p251) target = $region52
        $region51: #{tpu_custom_call.1} parent=31 // pred_region
          %vm280 = vcmask 265352
          %281 = vst.msk [vmem:[#allocation2] sm:$0xf] %vm280, 0.0
        $region52: #{tpu_custom_call.1} parent=31 // pred_fallthru
          _
        %s282 = sadd.s32 %s204, 1
        %p283 = scmp.ge.s32.totalorder %s282, 0
        %p284 = scmp.lt.s32.totalorder %s282, 16
        %p285 = pnand %p283, %p284
        %p286 = pneg %p285
        // Predicated region
        $region53: #{tpu_custom_call.1} parent=31 // pred_check
          _
        $region54: #{tpu_custom_call.1} parent=31 // pred_check_branch
          %288 = sbr.rel (%p285) target = $region56
        $region55: #{tpu_custom_call.1} parent=31 // pred_region
          %s289 = scalar_lea.vmem %s180, %s282 [#allocation4]
          %v290 = vld [vmem:[%s289] sm:$0x1]
          %v291 = vld [vmem:[%s289 + $0x10] sm:$0x1]
          %v292 = vld [vmem:[%s289 + $0x20] sm:$0x1]
          %v293 = vld [vmem:[%s289 + $0x30] sm:$0x1]
          %v298 = vrot.slane %v291, 7
          %vm299 = vcmask 1041409
          %v300 = vsel %vm299, %v298, %v290
          %v301 = vrot.slane %v292, 6
          %vm302 = vcmask 1042434
          %v303 = vsel %vm302, %v301, %v300
          %v304 = vrot.slane %v293, 5
          %vm305 = vcmask 1043459
          %v306 = vsel %vm305, %v304, %v303
          %307 = vrot.lane.b32.xlu0 %v306, 33
          %v308 = vpop.permute.xlu0 %307
          %vm310 = vcmask 396552
          %311 = vst.msk [vmem:[#allocation2] sm:$0xf] %vm310, %v308
        $region56: #{tpu_custom_call.1} parent=31 // pred_fallthru
          _
        %p312 = pneg %p286
        // Predicated region
        $region57: #{tpu_custom_call.1} parent=31 // pred_check
          _
        $region58: #{tpu_custom_call.1} parent=31 // pred_check_branch
          %314 = sbr.rel (%p286) target = $region60
        $region59: #{tpu_custom_call.1} parent=31 // pred_region
          %vm315 = vcmask 396552
          %316 = vst.msk [vmem:[#allocation2] sm:$0xf] %vm315, 0.0
        $region60: #{tpu_custom_call.1} parent=31 // pred_fallthru
          _
        %s317 = sadd.s32 %s204, 2
        %p318 = scmp.ge.s32.totalorder %s317, 0
        %p319 = scmp.lt.s32.totalorder %s317, 16
        %p320 = pnand %p318, %p319
        %p321 = pneg %p320
        // Predicated region
        $region61: #{tpu_custom_call.1} parent=31 // pred_check
          _
        $region62: #{tpu_custom_call.1} parent=31 // pred_check_branch
          %323 = sbr.rel (%p320) target = $region64
        $region63: #{tpu_custom_call.1} parent=31 // pred_region
          %s324 = scalar_lea.vmem %s180, %s317 [#allocation4]
          %v325 = vld [vmem:[%s324] sm:$0x1]
          %v326 = vld [vmem:[%s324 + $0x10] sm:$0x1]
          %v327 = vld [vmem:[%s324 + $0x20] sm:$0x1]
          %v328 = vld [vmem:[%s324 + $0x30] sm:$0x1]
          %v333 = vrot.slane %v326, 7
          %vm334 = vcmask 1041409
          %v335 = vsel %vm334, %v333, %v325
          %v336 = vrot.slane %v327, 6
          %vm337 = vcmask 1042434
          %v338 = vsel %vm337, %v336, %v335
          %v339 = vrot.slane %v328, 5
          %vm340 = vcmask 1043459
          %v341 = vsel %vm340, %v339, %v338
          %342 = vrot.lane.b32.xlu0 %v341, 49
          %v343 = vpop.permute.xlu0 %342
          %vm345 = vcmask 527752
          %346 = vst.msk [vmem:[#allocation2] sm:$0xf] %vm345, %v343
        $region64: #{tpu_custom_call.1} parent=31 // pred_fallthru
          _
        %p347 = pneg %p321
        // Predicated region
        $region65: #{tpu_custom_call.1} parent=31 // pred_check
          _
        $region66: #{tpu_custom_call.1} parent=31 // pred_check_branch
          %349 = sbr.rel (%p321) target = $region68
        $region67: #{tpu_custom_call.1} parent=31 // pred_region
          %vm350 = vcmask 527752
          %351 = vst.msk [vmem:[#allocation2] sm:$0xf] %vm350, 0.0
        $region68: #{tpu_custom_call.1} parent=31 // pred_fallthru
          _
        %s352 = sadd.s32 %s204, 3
        %p353 = scmp.ge.s32.totalorder %s352, 0
        %p354 = scmp.lt.s32.totalorder %s352, 16
        %p355 = pnand %p353, %p354
        %p356 = pneg %p355
        // Predicated region
        $region69: #{tpu_custom_call.1} parent=31 // pred_check
          _
        $region70: #{tpu_custom_call.1} parent=31 // pred_check_branch
          %358 = sbr.rel (%p355) target = $region72
        $region71: #{tpu_custom_call.1} parent=31 // pred_region
          %s359 = scalar_lea.vmem %s180, %s352 [#allocation4]
          %v360 = vld [vmem:[%s359] sm:$0x1]
          %v361 = vld [vmem:[%s359 + $0x10] sm:$0x1]
          %v362 = vld [vmem:[%s359 + $0x20] sm:$0x1]
          %v363 = vld [vmem:[%s359 + $0x30] sm:$0x1]
          %v368 = vrot.slane %v361, 7
          %vm369 = vcmask 1041409
          %v370 = vsel %vm369, %v368, %v360
          %v371 = vrot.slane %v362, 6
          %vm372 = vcmask 1042434
          %v373 = vsel %vm372, %v371, %v370
          %v374 = vrot.slane %v363, 5
          %vm375 = vcmask 1043459
          %v376 = vsel %vm375, %v374, %v373
          %377 = vrot.lane.b32.xlu0 %v376, 65
          %v378 = vpop.permute.xlu0 %377
          %vm380 = vcmask 658952
          %381 = vst.msk [vmem:[#allocation2] sm:$0xf] %vm380, %v378
        $region72: #{tpu_custom_call.1} parent=31 // pred_fallthru
          _
        %p382 = pneg %p356
        // Predicated region
        $region73: #{tpu_custom_call.1} parent=31 // pred_check
          _
        $region74: #{tpu_custom_call.1} parent=31 // pred_check_branch
          %384 = sbr.rel (%p356) target = $region76
        $region75: #{tpu_custom_call.1} parent=31 // pred_region
          %vm385 = vcmask 658952
          %386 = vst.msk [vmem:[#allocation2] sm:$0xf] %vm385, 0.0
        $region76: #{tpu_custom_call.1} parent=31 // pred_fallthru
          _
        %s387 = sadd.s32 %s204, 4
        %p388 = scmp.ge.s32.totalorder %s387, 0
        %p389 = scmp.lt.s32.totalorder %s387, 16
        %p390 = pnand %p388, %p389
        %p391 = pneg %p390
        // Predicated region
        $region77: #{tpu_custom_call.1} parent=31 // pred_check
          _
        $region78: #{tpu_custom_call.1} parent=31 // pred_check_branch
          %393 = sbr.rel (%p390) target = $region80
        $region79: #{tpu_custom_call.1} parent=31 // pred_region
          %s394 = scalar_lea.vmem %s180, %s387 [#allocation4]
          %v395 = vld [vmem:[%s394] sm:$0x1]
          %v396 = vld [vmem:[%s394 + $0x10] sm:$0x1]
          %v397 = vld [vmem:[%s394 + $0x20] sm:$0x1]
          %v398 = vld [vmem:[%s394 + $0x30] sm:$0x1]
          %v403 = vrot.slane %v396, 7
          %vm404 = vcmask 1041409
          %v405 = vsel %vm404, %v403, %v395
          %v406 = vrot.slane %v397, 6
          %vm407 = vcmask 1042434
          %v408 = vsel %vm407, %v406, %v405
          %v409 = vrot.slane %v398, 5
          %vm410 = vcmask 1043459
          %v411 = vsel %vm410, %v409, %v408
          %412 = vrot.lane.b32.xlu0 %v411, 81
          %v413 = vpop.permute.xlu0 %412
          %vm415 = vcmask 790152
          %416 = vst.msk [vmem:[#allocation2] sm:$0xf] %vm415, %v413
        $region80: #{tpu_custom_call.1} parent=31 // pred_fallthru
          _
        %p417 = pneg %p391
        // Predicated region
        $region81: #{tpu_custom_call.1} parent=31 // pred_check
          _
        $region82: #{tpu_custom_call.1} parent=31 // pred_check_branch
          %419 = sbr.rel (%p391) target = $region84
        $region83: #{tpu_custom_call.1} parent=31 // pred_region
          %vm420 = vcmask 790152
          %421 = vst.msk [vmem:[#allocation2] sm:$0xf] %vm420, 0.0
        $region84: #{tpu_custom_call.1} parent=31 // pred_fallthru
          _
        %s422 = sadd.s32 %s204, 5
        %p423 = scmp.ge.s32.totalorder %s422, 0
        %p424 = scmp.lt.s32.totalorder %s422, 16
        %p425 = pnand %p423, %p424
        %p426 = pneg %p425
        // Predicated region
        $region85: #{tpu_custom_call.1} parent=31 // pred_check
          _
        $region86: #{tpu_custom_call.1} parent=31 // pred_check_branch
          %428 = sbr.rel (%p425) target = $region88
        $region87: #{tpu_custom_call.1} parent=31 // pred_region
          %s429 = scalar_lea.vmem %s180, %s422 [#allocation4]
          %v430 = vld [vmem:[%s429] sm:$0x1]
          %v431 = vld [vmem:[%s429 + $0x10] sm:$0x1]
          %v432 = vld [vmem:[%s429 + $0x20] sm:$0x1]
          %v433 = vld [vmem:[%s429 + $0x30] sm:$0x1]
          %v438 = vrot.slane %v431, 7
          %vm439 = vcmask 1041409
          %v440 = vsel %vm439, %v438, %v430
          %v441 = vrot.slane %v432, 6
          %vm442 = vcmask 1042434
          %v443 = vsel %vm442, %v441, %v440
          %v444 = vrot.slane %v433, 5
          %vm445 = vcmask 1043459
          %v446 = vsel %vm445, %v444, %v443
          %447 = vrot.lane.b32.xlu0 %v446, 97
          %v448 = vpop.permute.xlu0 %447
          %vm450 = vcmask 921352
          %451 = vst.msk [vmem:[#allocation2] sm:$0xf] %vm450, %v448
        $region88: #{tpu_custom_call.1} parent=31 // pred_fallthru
          _
        %p452 = pneg %p426
        // Predicated region
        $region89: #{tpu_custom_call.1} parent=31 // pred_check
          _
        $region90: #{tpu_custom_call.1} parent=31 // pred_check_branch
          %454 = sbr.rel (%p426) target = $region92
        $region91: #{tpu_custom_call.1} parent=31 // pred_region
          %vm455 = vcmask 921352
          %456 = vst.msk [vmem:[#allocation2] sm:$0xf] %vm455, 0.0
        $region92: #{tpu_custom_call.1} parent=31 // pred_fallthru
          _
        %s457 = sadd.s32 %s204, 6
        %p458 = scmp.ge.s32.totalorder %s457, 0
        %p459 = scmp.lt.s32.totalorder %s457, 16
        %p460 = pnand %p458, %p459
        %p461 = pneg %p460
        // Predicated region
        $region93: #{tpu_custom_call.1} parent=31 // pred_check
          _
        $region94: #{tpu_custom_call.1} parent=31 // pred_check_branch
          %463 = sbr.rel (%p460) target = $region96
        $region95: #{tpu_custom_call.1} parent=31 // pred_region
          %s464 = scalar_lea.vmem %s180, %s457 [#allocation4]
          %v465 = vld [vmem:[%s464] sm:$0x1]
          %v466 = vld [vmem:[%s464 + $0x10] sm:$0x1]
          %v467 = vld [vmem:[%s464 + $0x20] sm:$0x1]
          %v468 = vld [vmem:[%s464 + $0x30] sm:$0x1]
          %v473 = vrot.slane %v466, 7
          %vm474 = vcmask 1041409
          %v475 = vsel %vm474, %v473, %v465
          %v476 = vrot.slane %v467, 6
          %vm477 = vcmask 1042434
          %v478 = vsel %vm477, %v476, %v475
          %v479 = vrot.slane %v468, 5
          %vm480 = vcmask 1043459
          %v481 = vsel %vm480, %v479, %v478
          %482 = vrot.lane.b32.xlu0 %v481, 113
          %v483 = vpop.permute.xlu0 %482
          %vm485 = vcmask 1044360
          %486 = vst.msk [vmem:[#allocation2] sm:$0xf] %vm485, %v483
          %487 = vst.msk [vmem:[#allocation2 + $0x8] sm:$0xf] %vm210, %v483
        $region96: #{tpu_custom_call.1} parent=31 // pred_fallthru
          _
        %p488 = pneg %p461
        // Predicated region
        $region97: #{tpu_custom_call.1} parent=31 // pred_check
          _
        $region98: #{tpu_custom_call.1} parent=31 // pred_check_branch
          %490 = sbr.rel (%p461) target = $region100
        $region99: #{tpu_custom_call.1} parent=31 // pred_region
          %vm491 = vcmask 1044360
          %492 = vst.msk [vmem:[#allocation2] sm:$0xf] %vm491, 0.0
          %493 = vst.msk [vmem:[#allocation2 + $0x8] sm:$0xf] %vm210, 0.0
        $region100: #{tpu_custom_call.1} parent=31 // pred_fallthru
          _
        %s494 = sadd.s32 %s204, 7
        %p495 = scmp.ge.s32.totalorder %s494, 0
        %p496 = scmp.lt.s32.totalorder %s494, 16
        %p497 = pnand %p495, %p496
        %p498 = pneg %p497
        // Predicated region
        $region101: #{tpu_custom_call.1} parent=31 // pred_check
          _
        $region102: #{tpu_custom_call.1} parent=31 // pred_check_branch
          %500 = sbr.rel (%p497) target = $region104
        $region103: #{tpu_custom_call.1} parent=31 // pred_region
          %s501 = scalar_lea.vmem %s180, %s494 [#allocation4]
          %v502 = vld [vmem:[%s501] sm:$0x1]
          %v503 = vld [vmem:[%s501 + $0x10] sm:$0x1]
          %v504 = vld [vmem:[%s501 + $0x20] sm:$0x1]
          %v505 = vld [vmem:[%s501 + $0x30] sm:$0x1]
          %v510 = vrot.slane %v503, 7
          %vm511 = vcmask 1041409
          %v512 = vsel %vm511, %v510, %v502
          %v513 = vrot.slane %v504, 6
          %vm514 = vcmask 1042434
          %v515 = vsel %vm514, %v513, %v512
          %v516 = vrot.slane %v505, 5
          %vm517 = vcmask 1043459
          %v518 = vsel %vm517, %v516, %v515
          %519 = vrot.lane.b32.xlu0 %v518, 1
          %v520 = vpop.permute.xlu0 %519
          %vm522 = vcmask 134152
          %523 = vst.msk [vmem:[#allocation2 + $0x8] sm:$0xf] %vm522, %v520
        $region104: #{tpu_custom_call.1} parent=31 // pred_fallthru
          _
        %p524 = pneg %p498
        // Predicated region
        $region105: #{tpu_custom_call.1} parent=31 // pred_check
          _
        $region106: #{tpu_custom_call.1} parent=31 // pred_check_branch
          %526 = sbr.rel (%p498) target = $region108
        $region107: #{tpu_custom_call.1} parent=31 // pred_region
          %vm527 = vcmask 134152
          %528 = vst.msk [vmem:[#allocation2 + $0x8] sm:$0xf] %vm527, 0.0
        $region108: #{tpu_custom_call.1} parent=31 // pred_fallthru
          _
        %s529 = sadd.s32 %s204, 8
        %p530 = scmp.ge.s32.totalorder %s529, 0
        %p531 = scmp.lt.s32.totalorder %s529, 16
        %p532 = pnand %p530, %p531
        %p533 = pneg %p532
        // Predicated region
        $region109: #{tpu_custom_call.1} parent=31 // pred_check
          _
        $region110: #{tpu_custom_call.1} parent=31 // pred_check_branch
          %535 = sbr.rel (%p532) target = $region112
        $region111: #{tpu_custom_call.1} parent=31 // pred_region
          %s536 = scalar_lea.vmem %s180, %s529 [#allocation4]
          %v537 = vld [vmem:[%s536] sm:$0x1]
          %v538 = vld [vmem:[%s536 + $0x10] sm:$0x1]
          %v539 = vld [vmem:[%s536 + $0x20] sm:$0x1]
          %v540 = vld [vmem:[%s536 + $0x30] sm:$0x1]
          %v545 = vrot.slane %v538, 7
          %vm546 = vcmask 1041409
          %v547 = vsel %vm546, %v545, %v537
          %v548 = vrot.slane %v539, 6
          %vm549 = vcmask 1042434
          %v550 = vsel %vm549, %v548, %v547
          %v551 = vrot.slane %v540, 5
          %vm552 = vcmask 1043459
          %v553 = vsel %vm552, %v551, %v550
          %554 = vrot.lane.b32.xlu0 %v553, 17
          %v555 = vpop.permute.xlu0 %554
          %vm557 = vcmask 265352
          %558 = vst.msk [vmem:[#allocation2 + $0x8] sm:$0xf] %vm557, %v555
        $region112: #{tpu_custom_call.1} parent=31 // pred_fallthru
          _
        %p559 = pneg %p533
        // Predicated region
        $region113: #{tpu_custom_call.1} parent=31 // pred_check
          _
        $region114: #{tpu_custom_call.1} parent=31 // pred_check_branch
          %561 = sbr.rel (%p533) target = $region116
        $region115: #{tpu_custom_call.1} parent=31 // pred_region
          %vm562 = vcmask 265352
          %563 = vst.msk [vmem:[#allocation2 + $0x8] sm:$0xf] %vm562, 0.0
        $region116: #{tpu_custom_call.1} parent=31 // pred_fallthru
          _
        %s564 = sadd.s32 %s204, 9
        %p565 = scmp.ge.s32.totalorder %s564, 0
        %p566 = scmp.lt.s32.totalorder %s564, 16
        %p567 = pnand %p565, %p566
        %p568 = pneg %p567
        // Predicated region
        $region117: #{tpu_custom_call.1} parent=31 // pred_check
          _
        $region118: #{tpu_custom_call.1} parent=31 // pred_check_branch
          %570 = sbr.rel (%p567) target = $region120
        $region119: #{tpu_custom_call.1} parent=31 // pred_region
          %s571 = scalar_lea.vmem %s180, %s564 [#allocation4]
          %v572 = vld [vmem:[%s571] sm:$0x1]
          %v573 = vld [vmem:[%s571 + $0x10] sm:$0x1]
          %v574 = vld [vmem:[%s571 + $0x20] sm:$0x1]
          %v575 = vld [vmem:[%s571 + $0x30] sm:$0x1]
          %v580 = vrot.slane %v573, 7
          %vm581 = vcmask 1041409
          %v582 = vsel %vm581, %v580, %v572
          %v583 = vrot.slane %v574, 6
          %vm584 = vcmask 1042434
          %v585 = vsel %vm584, %v583, %v582
          %v586 = vrot.slane %v575, 5
          %vm587 = vcmask 1043459
          %v588 = vsel %vm587, %v586, %v585
          %589 = vrot.lane.b32.xlu0 %v588, 33
          %v590 = vpop.permute.xlu0 %589
          %vm592 = vcmask 396552
          %593 = vst.msk [vmem:[#allocation2 + $0x8] sm:$0xf] %vm592, %v590
        $region120: #{tpu_custom_call.1} parent=31 // pred_fallthru
          _
        %p594 = pneg %p568
        // Predicated region
        $region121: #{tpu_custom_call.1} parent=31 // pred_check
          _
        $region122: #{tpu_custom_call.1} parent=31 // pred_check_branch
          %596 = sbr.rel (%p568) target = $region124
        $region123: #{tpu_custom_call.1} parent=31 // pred_region
          %vm597 = vcmask 396552
          %598 = vst.msk [vmem:[#allocation2 + $0x8] sm:$0xf] %vm597, 0.0
        $region124: #{tpu_custom_call.1} parent=31 // pred_fallthru
          _
        %s599 = sadd.s32 %s204, 10
        %p600 = scmp.ge.s32.totalorder %s599, 0
        %p601 = scmp.lt.s32.totalorder %s599, 16
        %p602 = pnand %p600, %p601
        %p603 = pneg %p602
        // Predicated region
        $region125: #{tpu_custom_call.1} parent=31 // pred_check
          _
        $region126: #{tpu_custom_call.1} parent=31 // pred_check_branch
          %605 = sbr.rel (%p602) target = $region128
        $region127: #{tpu_custom_call.1} parent=31 // pred_region
          %s606 = scalar_lea.vmem %s180, %s599 [#allocation4]
          %v607 = vld [vmem:[%s606] sm:$0x1]
          %v608 = vld [vmem:[%s606 + $0x10] sm:$0x1]
          %v609 = vld [vmem:[%s606 + $0x20] sm:$0x1]
          %v610 = vld [vmem:[%s606 + $0x30] sm:$0x1]
          %v615 = vrot.slane %v608, 7
          %vm616 = vcmask 1041409
          %v617 = vsel %vm616, %v615, %v607
          %v618 = vrot.slane %v609, 6
          %vm619 = vcmask 1042434
          %v620 = vsel %vm619, %v618, %v617
          %v621 = vrot.slane %v610, 5
          %vm622 = vcmask 1043459
          %v623 = vsel %vm622, %v621, %v620
          %624 = vrot.lane.b32.xlu0 %v623, 49
          %v625 = vpop.permute.xlu0 %624
          %vm627 = vcmask 527752
          %628 = vst.msk [vmem:[#allocation2 + $0x8] sm:$0xf] %vm627, %v625
        $region128: #{tpu_custom_call.1} parent=31 // pred_fallthru
          _
        %p629 = pneg %p603
        // Predicated region
        $region129: #{tpu_custom_call.1} parent=31 // pred_check
          _
        $region130: #{tpu_custom_call.1} parent=31 // pred_check_branch
          %631 = sbr.rel (%p603) target = $region132
        $region131: #{tpu_custom_call.1} parent=31 // pred_region
          %vm632 = vcmask 527752
          %633 = vst.msk [vmem:[#allocation2 + $0x8] sm:$0xf] %vm632, 0.0
        $region132: #{tpu_custom_call.1} parent=31 // pred_fallthru
          _
        %s634 = sadd.s32 %s204, 11
        %p635 = scmp.ge.s32.totalorder %s634, 0
        %p636 = scmp.lt.s32.totalorder %s634, 16
        %p637 = pnand %p635, %p636
        %p638 = pneg %p637
        // Predicated region
        $region133: #{tpu_custom_call.1} parent=31 // pred_check
          _
        $region134: #{tpu_custom_call.1} parent=31 // pred_check_branch
          %640 = sbr.rel (%p637) target = $region136
        $region135: #{tpu_custom_call.1} parent=31 // pred_region
          %s641 = scalar_lea.vmem %s180, %s634 [#allocation4]
          %v642 = vld [vmem:[%s641] sm:$0x1]
          %v643 = vld [vmem:[%s641 + $0x10] sm:$0x1]
          %v644 = vld [vmem:[%s641 + $0x20] sm:$0x1]
          %v645 = vld [vmem:[%s641 + $0x30] sm:$0x1]
          %v650 = vrot.slane %v643, 7
          %vm651 = vcmask 1041409
          %v652 = vsel %vm651, %v650, %v642
          %v653 = vrot.slane %v644, 6
          %vm654 = vcmask 1042434
          %v655 = vsel %vm654, %v653, %v652
          %v656 = vrot.slane %v645, 5
          %vm657 = vcmask 1043459
          %v658 = vsel %vm657, %v656, %v655
          %659 = vrot.lane.b32.xlu0 %v658, 65
          %v660 = vpop.permute.xlu0 %659
          %vm662 = vcmask 658952
          %663 = vst.msk [vmem:[#allocation2 + $0x8] sm:$0xf] %vm662, %v660
        $region136: #{tpu_custom_call.1} parent=31 // pred_fallthru
          _
        %p664 = pneg %p638
        // Predicated region
        $region137: #{tpu_custom_call.1} parent=31 // pred_check
          _
        $region138: #{tpu_custom_call.1} parent=31 // pred_check_branch
          %666 = sbr.rel (%p638) target = $region140
        $region139: #{tpu_custom_call.1} parent=31 // pred_region
          %vm667 = vcmask 658952
          %668 = vst.msk [vmem:[#allocation2 + $0x8] sm:$0xf] %vm667, 0.0
        $region140: #{tpu_custom_call.1} parent=31 // pred_fallthru
          _
        %s669 = sadd.s32 %s204, 12
        %p670 = scmp.ge.s32.totalorder %s669, 0
        %p671 = scmp.lt.s32.totalorder %s669, 16
        %p672 = pnand %p670, %p671
        %p673 = pneg %p672
        // Predicated region
        $region141: #{tpu_custom_call.1} parent=31 // pred_check
          _
        $region142: #{tpu_custom_call.1} parent=31 // pred_check_branch
          %675 = sbr.rel (%p672) target = $region144
        $region143: #{tpu_custom_call.1} parent=31 // pred_region
          %s676 = scalar_lea.vmem %s180, %s669 [#allocation4]
          %v677 = vld [vmem:[%s676] sm:$0x1]
          %v678 = vld [vmem:[%s676 + $0x10] sm:$0x1]
          %v679 = vld [vmem:[%s676 + $0x20] sm:$0x1]
          %v680 = vld [vmem:[%s676 + $0x30] sm:$0x1]
          %v685 = vrot.slane %v678, 7
          %vm686 = vcmask 1041409
          %v687 = vsel %vm686, %v685, %v677
          %v688 = vrot.slane %v679, 6
          %vm689 = vcmask 1042434
          %v690 = vsel %vm689, %v688, %v687
          %v691 = vrot.slane %v680, 5
          %vm692 = vcmask 1043459
          %v693 = vsel %vm692, %v691, %v690
          %694 = vrot.lane.b32.xlu0 %v693, 81
          %v695 = vpop.permute.xlu0 %694
          %vm697 = vcmask 790152
          %698 = vst.msk [vmem:[#allocation2 + $0x8] sm:$0xf] %vm697, %v695
        $region144: #{tpu_custom_call.1} parent=31 // pred_fallthru
          _
        %p699 = pneg %p673
        // Predicated region
        $region145: #{tpu_custom_call.1} parent=31 // pred_check
          _
        $region146: #{tpu_custom_call.1} parent=31 // pred_check_branch
          %701 = sbr.rel (%p673) target = $region148
        $region147: #{tpu_custom_call.1} parent=31 // pred_region
          %vm702 = vcmask 790152
          %703 = vst.msk [vmem:[#allocation2 + $0x8] sm:$0xf] %vm702, 0.0
        $region148: #{tpu_custom_call.1} parent=31 // pred_fallthru
          _
        %s704 = sadd.s32 %s204, 13
        %p705 = scmp.ge.s32.totalorder %s704, 0
        %p706 = scmp.lt.s32.totalorder %s704, 16
        %p707 = pnand %p705, %p706
        %p708 = pneg %p707
        // Predicated region
        $region149: #{tpu_custom_call.1} parent=31 // pred_check
          _
        $region150: #{tpu_custom_call.1} parent=31 // pred_check_branch
          %710 = sbr.rel (%p707) target = $region152
        $region151: #{tpu_custom_call.1} parent=31 // pred_region
          %s711 = scalar_lea.vmem %s180, %s704 [#allocation4]
          %v712 = vld [vmem:[%s711] sm:$0x1]
          %v713 = vld [vmem:[%s711 + $0x10] sm:$0x1]
          %v714 = vld [vmem:[%s711 + $0x20] sm:$0x1]
          %v715 = vld [vmem:[%s711 + $0x30] sm:$0x1]
          %v720 = vrot.slane %v713, 7
          %vm721 = vcmask 1041409
          %v722 = vsel %vm721, %v720, %v712
          %v723 = vrot.slane %v714, 6
          %vm724 = vcmask 1042434
          %v725 = vsel %vm724, %v723, %v722
          %v726 = vrot.slane %v715, 5
          %vm727 = vcmask 1043459
          %v728 = vsel %vm727, %v726, %v725
          %729 = vrot.lane.b32.xlu0 %v728, 97
          %v730 = vpop.permute.xlu0 %729
          %vm732 = vcmask 921352
          %733 = vst.msk [vmem:[#allocation2 + $0x8] sm:$0xf] %vm732, %v730
        $region152: #{tpu_custom_call.1} parent=31 // pred_fallthru
          _
        %p734 = pneg %p708
        // Predicated region
        $region153: #{tpu_custom_call.1} parent=31 // pred_check
          _
        $region154: #{tpu_custom_call.1} parent=31 // pred_check_branch
          %736 = sbr.rel (%p708) target = $region156
        $region155: #{tpu_custom_call.1} parent=31 // pred_region
          %vm737 = vcmask 921352
          %738 = vst.msk [vmem:[#allocation2 + $0x8] sm:$0xf] %vm737, 0.0
        $region156: #{tpu_custom_call.1} parent=31 // pred_fallthru
          _
        %s739 = sadd.s32 %s204, 14
        %p740 = scmp.ge.s32.totalorder %s739, 0
        %p741 = scmp.lt.s32.totalorder %s739, 16
        %p742 = pnand %p740, %p741
        %p743 = pneg %p742
        // Predicated region
        $region157: #{tpu_custom_call.1} parent=31 // pred_check
          _
        $region158: #{tpu_custom_call.1} parent=31 // pred_check_branch
          %745 = sbr.rel (%p742) target = $region160
        $region159: #{tpu_custom_call.1} parent=31 // pred_region
          %s746 = scalar_lea.vmem %s180, %s739 [#allocation4]
          %v747 = vld [vmem:[%s746] sm:$0x1]
          %v748 = vld [vmem:[%s746 + $0x10] sm:$0x1]
          %v749 = vld [vmem:[%s746 + $0x20] sm:$0x1]
          %v750 = vld [vmem:[%s746 + $0x30] sm:$0x1]
          %v755 = vrot.slane %v748, 7
          %vm756 = vcmask 1041409
          %v757 = vsel %vm756, %v755, %v747
          %v758 = vrot.slane %v749, 6
          %vm759 = vcmask 1042434
          %v760 = vsel %vm759, %v758, %v757
          %v761 = vrot.slane %v750, 5
          %vm762 = vcmask 1043459
          %v763 = vsel %vm762, %v761, %v760
          %764 = vrot.lane.b32.xlu0 %v763, 113
          %v765 = vpop.permute.xlu0 %764
          %vm767 = vcmask 1044360
          %768 = vst.msk [vmem:[#allocation2 + $0x8] sm:$0xf] %vm767, %v765
          %769 = vst.msk [vmem:[#allocation2 + $0x10] sm:$0xf] %vm210, %v765
        $region160: #{tpu_custom_call.1} parent=31 // pred_fallthru
          _
        %p770 = pneg %p743
        // Predicated region
        $region161: #{tpu_custom_call.1} parent=31 // pred_check
          _
        $region162: #{tpu_custom_call.1} parent=31 // pred_check_branch
          %772 = sbr.rel (%p743) target = $region164
        $region163: #{tpu_custom_call.1} parent=31 // pred_region
          %vm773 = vcmask 1044360
          %774 = vst.msk [vmem:[#allocation2 + $0x8] sm:$0xf] %vm773, 0.0
          %775 = vst.msk [vmem:[#allocation2 + $0x10] sm:$0xf] %vm210, 0.0
        $region164: #{tpu_custom_call.1} parent=31 // pred_fallthru
          _
        %s776 = sadd.s32 %s204, 15
        %p777 = scmp.ge.s32.totalorder %s776, 0
        %p778 = scmp.lt.s32.totalorder %s776, 16
        %p779 = pnand %p777, %p778
        %p780 = pneg %p779
        // Predicated region
        $region165: #{tpu_custom_call.1} parent=31 // pred_check
          _
        $region166: #{tpu_custom_call.1} parent=31 // pred_check_branch
          %782 = sbr.rel (%p779) target = $region168
        $region167: #{tpu_custom_call.1} parent=31 // pred_region
          %s783 = scalar_lea.vmem %s180, %s776 [#allocation4]
          %v784 = vld [vmem:[%s783] sm:$0x1]
          %v785 = vld [vmem:[%s783 + $0x10] sm:$0x1]
          %v786 = vld [vmem:[%s783 + $0x20] sm:$0x1]
          %v787 = vld [vmem:[%s783 + $0x30] sm:$0x1]
          %v792 = vrot.slane %v785, 7
          %vm793 = vcmask 1041409
          %v794 = vsel %vm793, %v792, %v784
          %v795 = vrot.slane %v786, 6
          %vm796 = vcmask 1042434
          %v797 = vsel %vm796, %v795, %v794
          %v798 = vrot.slane %v787, 5
          %vm799 = vcmask 1043459
          %v800 = vsel %vm799, %v798, %v797
          %801 = vrot.lane.b32.xlu0 %v800, 1
          %v802 = vpop.permute.xlu0 %801
          %vm804 = vcmask 134152
          %805 = vst.msk [vmem:[#allocation2 + $0x10] sm:$0xf] %vm804, %v802
        $region168: #{tpu_custom_call.1} parent=31 // pred_fallthru
          _
        %p806 = pneg %p780
        // Predicated region
        $region169: #{tpu_custom_call.1} parent=31 // pred_check
          _
        $region170: #{tpu_custom_call.1} parent=31 // pred_check_branch
          %808 = sbr.rel (%p780) target = $region172
        $region171: #{tpu_custom_call.1} parent=31 // pred_region
          %vm809 = vcmask 134152
          %810 = vst.msk [vmem:[#allocation2 + $0x10] sm:$0xf] %vm809, 0.0
        $region172: #{tpu_custom_call.1} parent=31 // pred_fallthru
          _
        %s811 = sadd.s32 %s204, 16
        %p812 = scmp.ge.s32.totalorder %s811, 0
        %p813 = scmp.lt.s32.totalorder %s811, 16
        %p814 = pnand %p812, %p813
        %p815 = pneg %p814
        // Predicated region
        $region173: #{tpu_custom_call.1} parent=31 // pred_check
          _
        $region174: #{tpu_custom_call.1} parent=31 // pred_check_branch
          %817 = sbr.rel (%p814) target = $region176
        $region175: #{tpu_custom_call.1} parent=31 // pred_region
          %s818 = scalar_lea.vmem %s180, %s811 [#allocation4]
          %v819 = vld [vmem:[%s818] sm:$0x1]
          %v820 = vld [vmem:[%s818 + $0x10] sm:$0x1]
          %v821 = vld [vmem:[%s818 + $0x20] sm:$0x1]
          %v822 = vld [vmem:[%s818 + $0x30] sm:$0x1]
          %v827 = vrot.slane %v820, 7
          %vm828 = vcmask 1041409
          %v829 = vsel %vm828, %v827, %v819
          %v830 = vrot.slane %v821, 6
          %vm831 = vcmask 1042434
          %v832 = vsel %vm831, %v830, %v829
          %v833 = vrot.slane %v822, 5
          %vm834 = vcmask 1043459
          %v835 = vsel %vm834, %v833, %v832
          %836 = vrot.lane.b32.xlu0 %v835, 17
          %v837 = vpop.permute.xlu0 %836
          %vm839 = vcmask 265352
          %840 = vst.msk [vmem:[#allocation2 + $0x10] sm:$0xf] %vm839, %v837
        $region176: #{tpu_custom_call.1} parent=31 // pred_fallthru
          _
        %p841 = pneg %p815
        // Predicated region
        $region177: #{tpu_custom_call.1} parent=31 // pred_check
          _
        $region178: #{tpu_custom_call.1} parent=31 // pred_check_branch
          %843 = sbr.rel (%p815) target = $region180
        $region179: #{tpu_custom_call.1} parent=31 // pred_region
          %vm844 = vcmask 265352
          %845 = vst.msk [vmem:[#allocation2 + $0x10] sm:$0xf] %vm844, 0.0
        $region180: #{tpu_custom_call.1} parent=31 // pred_fallthru
          _
        %v846 = vlaneseq
        %v847 = vand.u32 %v846, 127
        %v848 = vadd.s32 %v847, 128
        %vm849 = vcmp.lt.s32.totalorder %v847, 0
        %v850 = vsub.s32 0, %v847
        %v851 = vsel %vm849, %v850, %v847
        %v852 = vshrl.u32 %v851, 4
        %v853 = vand.u32 %v851, 15
        %v854 = vsub.s32 0, %v853
        %v855 = vsel %vm849, %v854, %v853
        %vm856 = vcmp.lt.s32.totalorder %v848, 0
        %v857 = vsub.s32 0, %v848
        %v858 = vsel %vm856, %v857, %v848
        %v859 = vshrl.u32 %v858, 4
        %v860 = vand.u32 %v858, 15
        %v861 = vsub.s32 0, %v860
        %v862 = vsel %vm856, %v861, %v860
        %vm863 = vcmp.ne.s32.totalorder %v855, 0
        %vm864 = vcmp.ne.s32.totalorder %v862, 0
        %vm865 = vcmp.lt.s32.totalorder %v855, 0
        %vm866 = vcmp.lt.s32.totalorder %v862, 0
        %vm867 = vmand %vm865, %vm863
        %vm868 = vmand %vm866, %vm864
        %v869 = vadd.s32 %v855, 16
        %v870 = vadd.s32 %v862, 16
        %v871 = vsel %vm867, %v869, %v855
        %v872 = vsel %vm868, %v870, %v862
        %vm873 = vcmp.ge.s32.totalorder %v871, 1
        %vm874 = vcmp.ge.s32.totalorder %v872, 1
        %vm875 = vcmp.lt.s32.totalorder %v871, 17
        %vm876 = vcmp.lt.s32.totalorder %v872, 17
        %vm877 = vmand %vm873, %vm875
        %vm878 = vmand %vm874, %vm876
        %v879 = vsel %vm877, 1, 0
        %v880 = vsel %vm878, 1, 0
        %vm881 = vcmp.eq.s32.totalorder %v879, 1
        %vm882 = vcmp.eq.s32.totalorder %v880, 1
        %vm883 = vcmp.ge.s32.totalorder %v871, 4294967295
        %vm884 = vcmp.ge.s32.totalorder %v872, 4294967295
        %vm885 = vcmp.lt.s32.totalorder %v871, 15
        %vm886 = vcmp.lt.s32.totalorder %v872, 15
        %vm887 = vmand %vm883, %vm885
        %vm888 = vmand %vm884, %vm886
        %v889 = vsel %vm887, 1, 0
        %v890 = vsel %vm888, 1, 0
        %vm891 = vcmp.eq.s32.totalorder %v889, 1
        %vm892 = vcmp.eq.s32.totalorder %v890, 1
        %v893 = vld [vmem:[#allocation2] sm:$0xff]
        %v894 = vld [vmem:[#allocation2 + $0x8] sm:$0xff]
        %v895 = vsel %vm881, %v893, 0.0
        %v896 = vsel %vm882, %v894, 0.0
        %897 = vst [vmem:[#allocation3] sm:$0xff] %v895
        %898 = vst [vmem:[#allocation3 + $0x8] sm:$0xff] %v896
        %v899 = vld [vmem:[#allocation2] sm:$0xff]
        %v900 = vld [vmem:[#allocation2 + $0x8] sm:$0xff]
        %v901 = vld [vmem:[#allocation2 + $0x10] sm:$0xff]
        %905 = vrot.lane.b32.xlu0 %v899, 127
        %v906 = vpop.permute.xlu0 %905
        %907 = vrot.lane.b32.xlu0 %v900, 127
        %v908 = vpop.permute.xlu0 %907
        %909 = vrot.lane.b32.xlu0 %v901, 127
        %v910 = vpop.permute.xlu0 %909
        %vm911 = vcmask 1039360
        %v912 = vsel %vm911, %v906, %v908
        %v913 = vsel %vm911, %v908, %v910
        %916 = vst [vmem:[#allocation3 + $0x10] sm:$0xff] %v912
        %917 = vst [vmem:[#allocation3 + $0x18] sm:$0xff] %v913
        %v918 = vld [vmem:[#allocation2] sm:$0xff]
        %v919 = vld [vmem:[#allocation2 + $0x8] sm:$0xff]
        %v920 = vld [vmem:[#allocation2 + $0x10] sm:$0xff]
        %924 = vrot.lane.b32.xlu0 %v918, 126
        %v925 = vpop.permute.xlu0 %924
        %926 = vrot.lane.b32.xlu0 %v919, 126
        %v927 = vpop.permute.xlu0 %926
        %928 = vrot.lane.b32.xlu0 %v920, 126
        %v929 = vpop.permute.xlu0 %928
        %vm930 = vcmask 1031168
        %v931 = vsel %vm930, %v925, %v927
        %v932 = vsel %vm930, %v927, %v929
        %v935 = vsel %vm891, %v931, 0.0
        %v936 = vsel %vm892, %v932, 0.0
        %937 = vst [vmem:[#allocation3 + $0x20] sm:$0xff] %v935
        %938 = vst [vmem:[#allocation3 + $0x28] sm:$0xff] %v936
        %v939 = vld [vmem:[#allocation2] sm:$0xff]
        %v940 = vld [vmem:[#allocation2 + $0x8] sm:$0xff]
        %v941 = vld [vmem:[#allocation2 + $0x10] sm:$0xff]
        %945 = vrot.lane.b32.xlu0 %v939, 112
        %v946 = vpop.permute.xlu0 %945
        %947 = vrot.lane.b32.xlu0 %v940, 112
        %v948 = vpop.permute.xlu0 %947
        %949 = vrot.lane.b32.xlu0 %v941, 112
        %v950 = vpop.permute.xlu0 %949
        %vm951 = vcmask 916480
        %v952 = vsel %vm951, %v946, %v948
        %v953 = vsel %vm951, %v948, %v950
        %v956 = vsel %vm881, %v952, 0.0
        %v957 = vsel %vm882, %v953, 0.0
        %958 = vst [vmem:[#allocation3 + $0x30] sm:$0xff] %v956
        %959 = vst [vmem:[#allocation3 + $0x38] sm:$0xff] %v957
        %v960 = vld [vmem:[#allocation2] sm:$0xff]
        %v961 = vld [vmem:[#allocation2 + $0x8] sm:$0xff]
        %v962 = vld [vmem:[#allocation2 + $0x10] sm:$0xff]
        %966 = vrot.lane.b32.xlu0 %v960, 111
        %v967 = vpop.permute.xlu0 %966
        %968 = vrot.lane.b32.xlu0 %v961, 111
        %v969 = vpop.permute.xlu0 %968
        %970 = vrot.lane.b32.xlu0 %v962, 111
        %v971 = vpop.permute.xlu0 %970
        %vm972 = vcmask 908288
        %v973 = vsel %vm972, %v967, %v969
        %v974 = vsel %vm972, %v969, %v971
        %977 = vst [vmem:[#allocation3 + $0x40] sm:$0xff] %v973
        %978 = vst [vmem:[#allocation3 + $0x48] sm:$0xff] %v974
        %v979 = vld [vmem:[#allocation2] sm:$0xff]
        %v980 = vld [vmem:[#allocation2 + $0x8] sm:$0xff]
        %v981 = vld [vmem:[#allocation2 + $0x10] sm:$0xff]
        %985 = vrot.lane.b32.xlu0 %v979, 110
        %v986 = vpop.permute.xlu0 %985
        %987 = vrot.lane.b32.xlu0 %v980, 110
        %v988 = vpop.permute.xlu0 %987
        %989 = vrot.lane.b32.xlu0 %v981, 110
        %v990 = vpop.permute.xlu0 %989
        %vm991 = vcmask 900096
        %v992 = vsel %vm991, %v986, %v988
        %v993 = vsel %vm991, %v988, %v990
        %v996 = vsel %vm891, %v992, 0.0
        %v997 = vsel %vm892, %v993, 0.0
        %998 = vst [vmem:[#allocation3 + $0x50] sm:$0xff] %v996
        %999 = vst [vmem:[#allocation3 + $0x58] sm:$0xff] %v997
        %v1000 = vld [vmem:[#allocation2] sm:$0xff]
        %v1001 = vld [vmem:[#allocation2 + $0x8] sm:$0xff]
        %v1002 = vld [vmem:[#allocation2 + $0x10] sm:$0xff]
        %1006 = vrot.lane.b32.xlu0 %v1000, 96
        %v1007 = vpop.permute.xlu0 %1006
        %1008 = vrot.lane.b32.xlu0 %v1001, 96
        %v1009 = vpop.permute.xlu0 %1008
        %1010 = vrot.lane.b32.xlu0 %v1002, 96
        %v1011 = vpop.permute.xlu0 %1010
        %vm1012 = vcmask 785408
        %v1013 = vsel %vm1012, %v1007, %v1009
        %v1014 = vsel %vm1012, %v1009, %v1011
        %v1017 = vsel %vm881, %v1013, 0.0
        %v1018 = vsel %vm882, %v1014, 0.0
        %1019 = vst [vmem:[#allocation3 + $0x60] sm:$0xff] %v1017
        %1020 = vst [vmem:[#allocation3 + $0x68] sm:$0xff] %v1018
        %v1021 = vld [vmem:[#allocation2] sm:$0xff]
        %v1022 = vld [vmem:[#allocation2 + $0x8] sm:$0xff]
        %v1023 = vld [vmem:[#allocation2 + $0x10] sm:$0xff]
        %1027 = vrot.lane.b32.xlu0 %v1021, 95
        %v1028 = vpop.permute.xlu0 %1027
        %1029 = vrot.lane.b32.xlu0 %v1022, 95
        %v1030 = vpop.permute.xlu0 %1029
        %1031 = vrot.lane.b32.xlu0 %v1023, 95
        %v1032 = vpop.permute.xlu0 %1031
        %vm1033 = vcmask 777216
        %v1034 = vsel %vm1033, %v1028, %v1030
        %v1035 = vsel %vm1033, %v1030, %v1032
        %1038 = vst [vmem:[#allocation3 + $0x70] sm:$0xff] %v1034
        %1039 = vst [vmem:[#allocation3 + $0x78] sm:$0xff] %v1035
        %v1040 = vld [vmem:[#allocation2] sm:$0xff]
        %v1041 = vld [vmem:[#allocation2 + $0x8] sm:$0xff]
        %v1042 = vld [vmem:[#allocation2 + $0x10] sm:$0xff]
        %1046 = vrot.lane.b32.xlu0 %v1040, 94
        %v1047 = vpop.permute.xlu0 %1046
        %1048 = vrot.lane.b32.xlu0 %v1041, 94
        %v1049 = vpop.permute.xlu0 %1048
        %1050 = vrot.lane.b32.xlu0 %v1042, 94
        %v1051 = vpop.permute.xlu0 %1050
        %vm1052 = vcmask 769024
        %v1053 = vsel %vm1052, %v1047, %v1049
        %v1054 = vsel %vm1052, %v1049, %v1051
        %v1057 = vsel %vm891, %v1053, 0.0
        %v1058 = vsel %vm892, %v1054, 0.0
        %1059 = vst [vmem:[#allocation3 + $0x80] sm:$0xff] %v1057
        %1060 = vst [vmem:[#allocation3 + $0x88] sm:$0xff] %v1058
        %v1061 = vld [vmem:[%s1] sm:$0xff]
        %v1062 = vld [vmem:[#allocation3] sm:$0xff]
        %v1063 = vld [vmem:[#allocation3 + $0x8] sm:$0xff]
        %v1064 = vld [vmem:[#allocation3 + $0x10] sm:$0xff]
        %v1065 = vld [vmem:[#allocation3 + $0x18] sm:$0xff]
        %v1066 = vld [vmem:[#allocation3 + $0x20] sm:$0xff]
        %v1067 = vld [vmem:[#allocation3 + $0x28] sm:$0xff]
        %v1068 = vld [vmem:[#allocation3 + $0x30] sm:$0xff]
        %v1069 = vld [vmem:[#allocation3 + $0x38] sm:$0xff]
        %v1070 = vld [vmem:[#allocation3 + $0x40] sm:$0xff]
        %v1071 = vld [vmem:[#allocation3 + $0x48] sm:$0xff]
        %v1072 = vld [vmem:[#allocation3 + $0x50] sm:$0xff]
        %v1073 = vld [vmem:[#allocation3 + $0x58] sm:$0xff]
        %v1074 = vld [vmem:[#allocation3 + $0x60] sm:$0xff]
        %v1075 = vld [vmem:[#allocation3 + $0x68] sm:$0xff]
        %v1076 = vld [vmem:[#allocation3 + $0x70] sm:$0xff]
        %v1077 = vld [vmem:[#allocation3 + $0x78] sm:$0xff]
        %v1078 = vld [vmem:[#allocation3 + $0x80] sm:$0xff]
        %v1079 = vld [vmem:[#allocation3 + $0x88] sm:$0xff]
        %v1080 = vld [vmem:[%s2] sm:$0xff]
        %1082 = vset.pattern.permute.xlu0 0
        %1083 = vperm.xlu0 %1082, %v1080
        %v1084 = vpop.permute.xlu0 %1083
        %vm1086 = vcmask 588800
        %v1088 = vsel %vm1086, %v1061, 0
        %1090 = vmatprep.subr.mxu0 0.0
        %1091 = vmatpush1.msra.mxu0 0.0
        %1092 = vmatprep.subr.mxu0 0.0
        %1093 = vmatpush1.msra.mxu0 0.0
        %1094 = vmatprep.subr.mxu0 0.0
        %1095 = vmatpush1.msra.mxu0 0.0
        %1096 = vmatprep.subr.mxu0 0.0
        %1097 = vmatpush1.msra.mxu0 0.0
        %1098 = vmatprep.subr.mxu0 0.0
        %1099 = vmatpush1.msra.mxu0 0.0
        %1100 = vmatprep.subr.mxu0 0.0
        %1101 = vmatpush1.msra.mxu0 0.0
        %1102 = vmatprep.subr.mxu0 0.0
        %1103 = vmatpush1.msra.mxu0 0.0
        %1104 = vmatprep.subr.mxu0 %v1079
        %1105 = vmatpush1.msra.mxu0 %v1078
        %1106 = vmatprep.subr.mxu0 %v1077
        %1107 = vmatpush1.msra.mxu0 %v1076
        %1108 = vmatprep.subr.mxu0 %v1075
        %1109 = vmatpush1.msra.mxu0 %v1074
        %1110 = vmatprep.subr.mxu0 %v1073
        %1111 = vmatpush1.msra.mxu0 %v1072
        %1112 = vmatprep.subr.mxu0 %v1071
        %1113 = vmatpush1.msra.mxu0 %v1070
        %1114 = vmatprep.subr.mxu0 %v1069
        %1115 = vmatpush1.msra.mxu0 %v1068
        %1116 = vmatprep.subr.mxu0 %v1067
        %1117 = vmatpush1.msra.mxu0 %v1066
        %1118 = vmatprep.subr.mxu0 %v1065
        %1119 = vmatpush1.msra.mxu0 %v1064
        %1120 = vmatprep.subr.mxu0 %v1063
        %1121 = vmatpush1.msra.mxu0 %v1062
        %1122 = vmatprep.subr.mxu0 0.0
        %1123 = vmatpush2.msra.mxu0 0.0
        %1124 = vmatprep.subr.mxu0 0.0
        %1125 = vmatpush2.msra.mxu0 0.0
        %1126 = vmatprep.subr.mxu0 0.0
        %1127 = vmatpush2.msra.mxu0 0.0
        %1128 = vmatprep.subr.mxu0 0.0
        %1129 = vmatpush2.msra.mxu0 0.0
        %1130 = vmatprep.subr.mxu0 0.0
        %1131 = vmatpush2.msra.mxu0 0.0
        %1132 = vmatprep.subr.mxu0 0.0
        %1133 = vmatpush2.msra.mxu0 0.0
        %1134 = vmatprep.subr.mxu0 0.0
        %1135 = vmatpush2.msra.mxu0 0.0
        %1136 = vmatprep.subr.mxu0 0.0
        %1137 = vmatpush2.msra.mxu0 0.0
        %1138 = vmatprep.subr.mxu0 0.0
        %1139 = vmatpush2.msra.mxu0 0.0
        %1140 = vmatprep.subr.mxu0 0.0
        %1141 = vmatpush2.msra.mxu0 0.0
        %1142 = vmatprep.subr.mxu0 0.0
        %1143 = vmatpush2.msra.mxu0 0.0
        %1144 = vmatprep.subr.mxu0 0.0
        %1145 = vmatpush2.msra.mxu0 0.0
        %1146 = vmatprep.subr.mxu0 0.0
        %1147 = vmatpush2.msra.mxu0 0.0
        %1148 = vmatprep.subr.mxu0 0.0
        %1149 = vmatpush2.msra.mxu0 0.0
        %1150 = vmatprep.subr.mxu0 0.0
        %1151 = vmatpush2.msra.mxu0 0.0
        %1152 = vmatprep.subr.mxu0 0.0
        %1153 = vmatpush2.msra.mxu0 0.0
        %1154 = vmatprep.mubr.f32.mxu0 0.0
        %1155 = vmatmul.mubr.f32.gmra.mxu0 %v1088
        %v1156 = vpop.f32.mrf.mxu0
        %v1157 = vadd.f32 %v1084, %v1156
        %v1158 = vpop.f32.mrf.mxu0
        %v1159 = vadd.f32 %v1084, %v1158
        %1160 = vdwg.mxu0
        %v1161 = vxor.u32 %v1157, 2147483648
        %v1162 = vxor.u32 %v1159, 2147483648
        %v1163 = vmul.f32 %v1161, 1.442695
        %v1164 = vpow.pop %v1163
        %v1165 = vmul.f32 %v1162, 1.442695
        %v1166 = vpow.pop %v1165
        %v1167 = vadd.f32 %v1164, 1.0
        %v1168 = vadd.f32 %v1166, 1.0
        %v1169 = vrcp.pop %v1167
        %v1170 = vmul.f32 1.0, %v1169
        %v1171 = vrcp.pop %v1168
        %v1172 = vmul.f32 1.0, %v1171
        %v1173 = vmul.f32 %v1157, %v1170
        %v1174 = vmul.f32 %v1159, %v1172
        %1175 = vst [vmem:[%s202] sm:$0xff] %v1173
        %1176 = vst [vmem:[%s202 + $0x8] sm:$0xff] %v1174
        %s1177 = sand.u32 %s110, 1
        %s1178 = scalar_lea.sflag [#allocation6], %s1177
        %s1179 = sand.u32 %s110, 1
        %s1180 = smul.addr %s1179, 16
        %s1181 = scalar_lea.vmem [#allocation7], %s1180
        // Predicated region
        $region181: #{tpu_custom_call.1} parent=31 // pred_check
          %p1182 = pneg %p120
        $region182: #{tpu_custom_call.1} parent=31 // pred_check_branch
          %1184 = sbr.rel (%p1182) target = $region184
        $region183: #{tpu_custom_call.1} parent=31 // pred_region
          %s1185 = smul.u32 2, %s25
          %s1187 = ssub.s32 256, 256
          %1188 = vsyncadd %s1178, %s1187
          %s1189 = smul.addr %s24, 2
          %s1190 = sadd.s32 %s1185, %s1189
          %s1191 = smul.addr %s1190, 128
          %s1192 = scalar_lea.hbm %s3, %s1191
          %s1194 = sshll.u32 %s1181, 4
          %s1195 = int_to_ptr.vmem [resolvable:$true] %s1194
          %1197 = dma.vmem_to_hbm [thread:$0]  %s1195, 256, %s1192, %s1178
        $region184: #{tpu_custom_call.1} parent=31 // pred_fallthru
          _
      $region32: #{tpu_custom_call.1} parent=5 // pred_fallthru
        _
      %p1198 = scmp.le.s32.totalorder 2, %s15
      // Predicated region
      $region185: #{tpu_custom_call.1} parent=5 // pred_check
        %p1199 = pneg %p1198
      $region186: #{tpu_custom_call.1} parent=5 // pred_check_branch
        %1201 = sbr.rel (%p1199) target = $region188
      $region187: #{tpu_custom_call.1} parent=5 // pred_region
        %s1202 = ssub.s32 %s15, 2
        // Predicated region
        $region189: #{tpu_custom_call.1} parent=187 // pred_check
          %p1203 = pneg %p126
        $region190: #{tpu_custom_call.1} parent=187 // pred_check_branch
          %1205 = sbr.rel (%p1203) target = $region192
        $region191: #{tpu_custom_call.1} parent=187 // pred_region
          %s1206 = sand.u32 %s111, 1
          %s1207 = scalar_lea.sflag [#allocation6], %s1206
          %s1208 = sand.u32 %s111, 1
          %s1209 = smul.addr %s1208, 16
          %s1210 = scalar_lea.vmem [#allocation7], %s1209
          %1211 = dma.done %s1207, 256
        $region192: #{tpu_custom_call.1} parent=187 // pred_fallthru
          _
      $region188: #{tpu_custom_call.1} parent=5 // pred_fallthru
        _
    $region6: #{tpu_custom_call.1} parent=1 // loop_footer
      %s19 = sadd.s32 1, %s15
    $region7: #{tpu_custom_call.1} parent=1 // loop_footer_branch
      %14 = sbr.rel target = $region3
    $region8: #{tpu_custom_call.1} parent=1 // loop_exit
      _
    %1212 = vsyncpa [#allocation5], 1
    %s1213 = scalar_lea.sflag [#allocation5], 1
    %1214 = vsyncpa %s1213, 1
    %1215 = vsyncpa [#allocation6], 1
    %s1216 = scalar_lea.sflag [#allocation6], 1
    %1217 = vsyncpa %s1216, 1

</llo_original>
